<compile_context>
chip_gen: v5e
topology: v5e:2x2
jax: 0.10.0
libtpu: 0.0.40
codegen_flags: <defaults>
</compile_context>

<pallas_src>
import jax
import jax.numpy as jnp
from jax.experimental import pallas as pl
from jax.experimental.pallas import tpu as pltpu


def gru_forward_kernel(x_ref, wih_ref, whh_ref, b_ref, h0_ref,
                       wlin_ref, blin_ref,
                       logp_ref, hn_ref):
    """All refs are full-array VMEM tiles (everything is tiny at these sizes).

    x_ref    : (T, I)       input sequence
    wih_ref  : (I, 3*Hp)    input->gates weights, gate slabs lane-padded to Hp
    whh_ref  : (Hp, 3*Hp)   hidden->gates weights, rows + gate slabs padded
    b_ref    : (2, 3*Hp)    row 0: b_ih + b_hh(r,z slabs)  [folded into xproj]
                            row 1: b_hn in the n slab only  [stays in the loop]
    h0_ref   : (1, Hp)      initial hidden state (padded lanes are zero)
    wlin_ref : (Hp, Op)     classifier weights (padded rows/cols are zero)
    blin_ref : (1, Op)      classifier bias (padded lanes are -1e30)
    logp_ref : (1, Op)      output: log-softmax(linear(h_T))
    hn_ref   : (1, Hp)      output: final hidden state
    """
    T = x_ref.shape[0]
    Hp = h0_ref.shape[1]

    # Hoisted loads: keep the recurrence weights/bias resident for all steps.
    w_hh = whh_ref[...]                       # (Hp, 3*Hp)
    b_hn = b_ref[1:2, 2 * Hp:3 * Hp]          # (1, Hp)  -- must stay under r*

    # Input projection (one big MXU matmul, off the serial path) with
    # b_ih and b_hr/b_hz already folded in via b_ref row 0.
    xproj = (jnp.dot(x_ref[...], wih_ref[...],
                     preferred_element_type=jnp.float32)
             + b_ref[0:1, :])                 # (T, 3*Hp), lives in vregs

    h = h0_ref[...]                           # (1, Hp)

    # Static unroll over the short, fixed-length recurrence.
    for t in range(T):
        xp = xproj[t:t + 1, :]                                     # static slice
        hp = jnp.dot(h, w_hh, preferred_element_type=jnp.float32)  # (1, 3*Hp)
        r = jax.nn.sigmoid(xp[:, 0 * Hp:1 * Hp] + hp[:, 0 * Hp:1 * Hp])
        z = jax.nn.sigmoid(xp[:, 1 * Hp:2 * Hp] + hp[:, 1 * Hp:2 * Hp])
        n = jnp.tanh(xp[:, 2 * Hp:3 * Hp] + r * (hp[:, 2 * Hp:3 * Hp] + b_hn))
        h = (1.0 - z) * n + z * h

    hn_ref[...] = h

    # Classifier head: Linear + numerically-stable LogSoftmax.
    # Padded logits are ~-1e30 (via blin padding) -> exp underflows to exactly 0.
    logits = (jnp.dot(h, wlin_ref[...], preferred_element_type=jnp.float32)
              + blin_ref[...])                # (1, Op)
    m = jnp.max(logits, axis=-1, keepdims=True)
    shifted = logits - m
    lse = jnp.log(jnp.sum(jnp.exp(shifted), axis=-1, keepdims=True))
    logp_ref[...] = shifted - lse


def _round_up(x, m):
    return ((x + m - 1) // m) * m


def _pad_gate_slabs(w, H, Hp):
    """Zero-pad each of the 3 GRU gate slabs along the last dim from H to Hp."""
    lead = w.shape[:-1]
    w3 = w.reshape(*lead, 3, H)
    w3 = jnp.pad(w3, [(0, 0)] * len(lead) + [(0, 0), (0, Hp - H)])
    return w3.reshape(*lead, 3 * Hp)


def gru_forward(x, hidden, params):
    """x: (T, I) float32; hidden: (num_layers=1, 1, H) float32.

    Returns (log_probs (1, O), hn (1, 1, H)) matching the PyTorch module.
    """
    T, I = x.shape
    H = params["whh_t"].shape[0]
    O = params["wlin_t"].shape[1]
    Hp = _round_up(H, 128)   # lane-align each gate to its own 128-lane slab
    Op = _round_up(O, 128)   # lane-dense output store

    # --- layout plumbing (pure padding / packing, no compute hoisting) -------
    wih_p = _pad_gate_slabs(params["wih_t"], H, Hp)                  # (I, 3Hp)
    whh_p = jnp.pad(_pad_gate_slabs(params["whh_t"], H, Hp),
                    ((0, Hp - H), (0, 0)))                           # (Hp, 3Hp)

    bih = params["bih"].reshape(3 * H)
    bhh = params["bhh"].reshape(3 * H)
    # row 0: b_ih (all gates) + b_hh for r,z gates (folded into xproj).
    # row 1: b_hn only (must stay inside the r* term in the loop).
    row0 = jnp.concatenate([bih[:2 * H] + bhh[:2 * H], bih[2 * H:]])
    row1 = jnp.concatenate([jnp.zeros((2 * H,), jnp.float32), bhh[2 * H:]])
    biases = _pad_gate_slabs(jnp.stack([row0, row1]), H, Hp)         # (2, 3Hp)

    wlin_p = jnp.pad(params["wlin_t"], ((0, Hp - H), (0, Op - O)))   # (Hp, Op)
    blin_p = jnp.pad(params["blin"], ((0, 0), (0, Op - O)),
                     constant_values=-1e30)                          # (1, Op)
    h0 = jnp.pad(hidden.reshape(1, H), ((0, 0), (0, Hp - H)))        # (1, Hp)

    vmem = pl.BlockSpec(memory_space=pltpu.MemorySpace.VMEM)

    logp, hn = pl.pallas_call(
        gru_forward_kernel,
        out_shape=(
            jax.ShapeDtypeStruct((1, Op), jnp.float32),
            jax.ShapeDtypeStruct((1, Hp), jnp.float32),
        ),
        in_specs=[vmem] * 7,
        out_specs=(vmem, vmem),
    )(x, wih_p, whh_p, biases, h0, wlin_p, blin_p)

    return logp[:, :O], hn[:, :H].reshape(1, 1, H)


def init_params(key, input_size, hidden_size, output_size):
    """Deterministic synthetic parameters (PyTorch-style uniform(-k, k))."""
    k = 1.0 / jnp.sqrt(jnp.float32(hidden_size))
    keys = jax.random.split(key, 6)
    u = lambda kk, shape: jax.random.uniform(kk, shape, jnp.float32, -k, k)
    # nn.GRU stores weight_ih_l0 (3H, I), weight_hh_l0 (3H, H); we pre-transpose.
    w_ih = u(keys[0], (3 * hidden_size, input_size))
    w_hh = u(keys[1], (3 * hidden_size, hidden_size))
    b_ih = u(keys[2], (3 * hidden_size,))
    b_hh = u(keys[3], (3 * hidden_size,))
    # nn.Linear stores (O, H); we pre-transpose.
    w_lin = u(keys[4], (output_size, hidden_size))
    b_lin = u(keys[5], (output_size,))
    return {
        "wih_t": w_ih.T,                       # (I, 3H)
        "whh_t": w_hh.T,                       # (H, 3H)
        "bih": b_ih.reshape(1, 3 * hidden_size),
        "bhh": b_hh.reshape(1, 3 * hidden_size),
        "wlin_t": w_lin.T,                     # (H, O)
        "blin": b_lin.reshape(1, output_size),
    }


def gru_forward_ref(x, hidden, params):
    """Pure-JAX reference mirroring torch.nn.GRU semantics, for sanity checking."""
    H = params["whh_t"].shape[0]
    h = hidden.reshape(1, H)
    xproj = x @ params["wih_t"] + params["bih"]
    for t in range(x.shape[0]):
        xp = xproj[t:t + 1]
        hp = h @ params["whh_t"] + params["bhh"]
        r = jax.nn.sigmoid(xp[:, :H] + hp[:, :H])
        z = jax.nn.sigmoid(xp[:, H:2 * H] + hp[:, H:2 * H])
        n = jnp.tanh(xp[:, 2 * H:] + r * hp[:, 2 * H:])
        h = (1.0 - z) * n + z * h
    logits = h @ params["wlin_t"] + params["blin"]
    return jax.nn.log_softmax(logits, axis=-1), h.reshape(1, 1, H)


if __name__ == "__main__":
    seq_len, input_size, hidden_size, output_size = 8, 16, 32, 16

    key = jax.random.PRNGKey(0)
    k_param, k_x = jax.random.split(key)
    params = init_params(k_param, input_size, hidden_size, output_size)

    x = jax.random.normal(k_x, (seq_len, input_size), jnp.float32)
    hidden = jnp.zeros((1, 1, hidden_size), jnp.float32)   # module.inithidden()

    logp, hn = gru_forward(x, hidden, params)
    jax.block_until_ready((logp, hn))

    # sanity check against pure-JAX reference
    logp_ref, hn_ref = gru_forward_ref(x, hidden, params)
    assert logp.shape == (1, output_size) and hn.shape == (1, 1, hidden_size)
    assert jnp.allclose(logp, logp_ref, atol=1e-5), "log-probs mismatch"
    assert jnp.allclose(hn, hn_ref, atol=1e-5), "hidden-state mismatch"

    print("KERNEL_OK")
</pallas_src>

<mosaic_0001>
module attributes {stable_mosaic.version = 11 : i64} {
  func.func @gru_forward_kernel(%arg0: memref<8x16xf32, #tpu.memory_space<vmem>>, %arg1: memref<16x384xf32, #tpu.memory_space<vmem>>, %arg2: memref<128x384xf32, #tpu.memory_space<vmem>>, %arg3: memref<2x384xf32, #tpu.memory_space<vmem>>, %arg4: memref<1x128xf32, #tpu.memory_space<vmem>>, %arg5: memref<128x128xf32, #tpu.memory_space<vmem>>, %arg6: memref<1x128xf32, #tpu.memory_space<vmem>>, %arg7: memref<1x128xf32, #tpu.memory_space<vmem>>, %arg8: memref<1x128xf32, #tpu.memory_space<vmem>>) attributes {dimension_semantics = [], scalar_prefetch = 0 : i64, scratch_operands = 0 : i64, tpu.core_type = #tpu.core_type<tc>} {
    %c0 = arith.constant 0 : index
    %c0_0 = arith.constant 0 : index
    %0 = vector.load %arg2[%c0, %c0_0] : memref<128x384xf32, #tpu.memory_space<vmem>>, vector<128x384xf32>
    %c1 = arith.constant 1 : index
    %c256 = arith.constant 256 : index
    %1 = vector.load %arg3[%c1, %c256] : memref<2x384xf32, #tpu.memory_space<vmem>>, vector<1x128xf32>
    %c0_1 = arith.constant 0 : index
    %c0_2 = arith.constant 0 : index
    %2 = vector.load %arg0[%c0_1, %c0_2] : memref<8x16xf32, #tpu.memory_space<vmem>>, vector<8x16xf32>
    %c0_3 = arith.constant 0 : index
    %c0_4 = arith.constant 0 : index
    %3 = vector.load %arg1[%c0_3, %c0_4] : memref<16x384xf32, #tpu.memory_space<vmem>>, vector<16x384xf32>
    %cst = arith.constant dense<0.000000e+00> : vector<8x384xf32>
    %4 = tpu.matmul %2, %3, %cst {dimension_numbers = #tpu.dot_dimension_numbers<[1], [0], [0], [1], [0, 0, 1, 1], [], []>} : vector<8x16xf32>, vector<16x384xf32>, vector<8x384xf32> -> vector<8x384xf32>
    %c0_5 = arith.constant 0 : index
    %c0_6 = arith.constant 0 : index
    %5 = vector.load %arg3[%c0_5, %c0_6] : memref<2x384xf32, #tpu.memory_space<vmem>>, vector<1x384xf32>
    %6 = vector.broadcast %5 : vector<1x384xf32> to vector<8x384xf32>
    %7 = arith.addf %4, %6 : vector<8x384xf32>
    %c0_7 = arith.constant 0 : index
    %c0_8 = arith.constant 0 : index
    %8 = vector.load %arg4[%c0_7, %c0_8] : memref<1x128xf32, #tpu.memory_space<vmem>>, vector<1x128xf32>
    %9 = vector.extract_strided_slice %7 {offsets = [0, 0], sizes = [1, 384], strides = [1, 1]} : vector<8x384xf32> to vector<1x384xf32>
    %cst_9 = arith.constant dense<0.000000e+00> : vector<1x384xf32>
    %10 = tpu.matmul %8, %0, %cst_9 {dimension_numbers = #tpu.dot_dimension_numbers<[1], [0], [0], [1], [0, 0, 1, 1], [], []>} : vector<1x128xf32>, vector<128x384xf32>, vector<1x384xf32> -> vector<1x384xf32>
    %11 = vector.extract_strided_slice %9 {offsets = [0, 0], sizes = [1, 128], strides = [1, 1]} : vector<1x384xf32> to vector<1x128xf32>
    %12 = vector.extract_strided_slice %10 {offsets = [0, 0], sizes = [1, 128], strides = [1, 1]} : vector<1x384xf32> to vector<1x128xf32>
    %13 = arith.addf %11, %12 : vector<1x128xf32>
    %14 = arith.negf %13 : vector<1x128xf32>
    %15 = math.exp %14 : vector<1x128xf32>
    %cst_10 = arith.constant 1.000000e+00 : f32
    %16 = vector.broadcast %cst_10 : f32 to vector<1x128xf32>
    %17 = arith.addf %16, %15 : vector<1x128xf32>
    %18 = arith.divf %16, %17 : vector<1x128xf32>
    %19 = vector.extract_strided_slice %9 {offsets = [0, 128], sizes = [1, 128], strides = [1, 1]} : vector<1x384xf32> to vector<1x128xf32>
    %20 = vector.extract_strided_slice %10 {offsets = [0, 128], sizes = [1, 128], strides = [1, 1]} : vector<1x384xf32> to vector<1x128xf32>
    %21 = arith.addf %19, %20 : vector<1x128xf32>
    %22 = arith.negf %21 : vector<1x128xf32>
    %23 = math.exp %22 : vector<1x128xf32>
    %cst_11 = arith.constant 1.000000e+00 : f32
    %24 = vector.broadcast %cst_11 : f32 to vector<1x128xf32>
    %25 = arith.addf %24, %23 : vector<1x128xf32>
    %26 = arith.divf %24, %25 : vector<1x128xf32>
    %27 = vector.extract_strided_slice %9 {offsets = [0, 256], sizes = [1, 128], strides = [1, 1]} : vector<1x384xf32> to vector<1x128xf32>
    %28 = vector.extract_strided_slice %10 {offsets = [0, 256], sizes = [1, 128], strides = [1, 1]} : vector<1x384xf32> to vector<1x128xf32>
    %29 = arith.addf %28, %1 : vector<1x128xf32>
    %30 = arith.mulf %18, %29 : vector<1x128xf32>
    %31 = arith.addf %27, %30 : vector<1x128xf32>
    %32 = math.tanh %31 : vector<1x128xf32>
    %cst_12 = arith.constant 1.000000e+00 : f32
    %33 = vector.broadcast %cst_12 : f32 to vector<1x128xf32>
    %34 = arith.subf %33, %26 : vector<1x128xf32>
    %35 = arith.mulf %34, %32 : vector<1x128xf32>
    %36 = arith.mulf %26, %8 : vector<1x128xf32>
    %37 = arith.addf %35, %36 : vector<1x128xf32>
    %38 = vector.extract_strided_slice %7 {offsets = [1, 0], sizes = [1, 384], strides = [1, 1]} : vector<8x384xf32> to vector<1x384xf32>
    %cst_13 = arith.constant dense<0.000000e+00> : vector<1x384xf32>
    %39 = tpu.matmul %37, %0, %cst_13 {dimension_numbers = #tpu.dot_dimension_numbers<[1], [0], [0], [1], [0, 0, 1, 1], [], []>} : vector<1x128xf32>, vector<128x384xf32>, vector<1x384xf32> -> vector<1x384xf32>
    %40 = vector.extract_strided_slice %38 {offsets = [0, 0], sizes = [1, 128], strides = [1, 1]} : vector<1x384xf32> to vector<1x128xf32>
    %41 = vector.extract_strided_slice %39 {offsets = [0, 0], sizes = [1, 128], strides = [1, 1]} : vector<1x384xf32> to vector<1x128xf32>
    %42 = arith.addf %40, %41 : vector<1x128xf32>
    %43 = arith.negf %42 : vector<1x128xf32>
    %44 = math.exp %43 : vector<1x128xf32>
    %cst_14 = arith.constant 1.000000e+00 : f32
    %45 = vector.broadcast %cst_14 : f32 to vector<1x128xf32>
    %46 = arith.addf %45, %44 : vector<1x128xf32>
    %47 = arith.divf %45, %46 : vector<1x128xf32>
    %48 = vector.extract_strided_slice %38 {offsets = [0, 128], sizes = [1, 128], strides = [1, 1]} : vector<1x384xf32> to vector<1x128xf32>
    %49 = vector.extract_strided_slice %39 {offsets = [0, 128], sizes = [1, 128], strides = [1, 1]} : vector<1x384xf32> to vector<1x128xf32>
    %50 = arith.addf %48, %49 : vector<1x128xf32>
    %51 = arith.negf %50 : vector<1x128xf32>
    %52 = math.exp %51 : vector<1x128xf32>
    %cst_15 = arith.constant 1.000000e+00 : f32
    %53 = vector.broadcast %cst_15 : f32 to vector<1x128xf32>
    %54 = arith.addf %53, %52 : vector<1x128xf32>
    %55 = arith.divf %53, %54 : vector<1x128xf32>
    %56 = vector.extract_strided_slice %38 {offsets = [0, 256], sizes = [1, 128], strides = [1, 1]} : vector<1x384xf32> to vector<1x128xf32>
    %57 = vector.extract_strided_slice %39 {offsets = [0, 256], sizes = [1, 128], strides = [1, 1]} : vector<1x384xf32> to vector<1x128xf32>
    %58 = arith.addf %57, %1 : vector<1x128xf32>
    %59 = arith.mulf %47, %58 : vector<1x128xf32>
    %60 = arith.addf %56, %59 : vector<1x128xf32>
    %61 = math.tanh %60 : vector<1x128xf32>
    %cst_16 = arith.constant 1.000000e+00 : f32
    %62 = vector.broadcast %cst_16 : f32 to vector<1x128xf32>
    %63 = arith.subf %62, %55 : vector<1x128xf32>
    %64 = arith.mulf %63, %61 : vector<1x128xf32>
    %65 = arith.mulf %55, %37 : vector<1x128xf32>
    %66 = arith.addf %64, %65 : vector<1x128xf32>
    %67 = vector.extract_strided_slice %7 {offsets = [2, 0], sizes = [1, 384], strides = [1, 1]} : vector<8x384xf32> to vector<1x384xf32>
    %cst_17 = arith.constant dense<0.000000e+00> : vector<1x384xf32>
    %68 = tpu.matmul %66, %0, %cst_17 {dimension_numbers = #tpu.dot_dimension_numbers<[1], [0], [0], [1], [0, 0, 1, 1], [], []>} : vector<1x128xf32>, vector<128x384xf32>, vector<1x384xf32> -> vector<1x384xf32>
    %69 = vector.extract_strided_slice %67 {offsets = [0, 0], sizes = [1, 128], strides = [1, 1]} : vector<1x384xf32> to vector<1x128xf32>
    %70 = vector.extract_strided_slice %68 {offsets = [0, 0], sizes = [1, 128], strides = [1, 1]} : vector<1x384xf32> to vector<1x128xf32>
    %71 = arith.addf %69, %70 : vector<1x128xf32>
    %72 = arith.negf %71 : vector<1x128xf32>
    %73 = math.exp %72 : vector<1x128xf32>
    %cst_18 = arith.constant 1.000000e+00 : f32
    %74 = vector.broadcast %cst_18 : f32 to vector<1x128xf32>
    %75 = arith.addf %74, %73 : vector<1x128xf32>
    %76 = arith.divf %74, %75 : vector<1x128xf32>
    %77 = vector.extract_strided_slice %67 {offsets = [0, 128], sizes = [1, 128], strides = [1, 1]} : vector<1x384xf32> to vector<1x128xf32>
    %78 = vector.extract_strided_slice %68 {offsets = [0, 128], sizes = [1, 128], strides = [1, 1]} : vector<1x384xf32> to vector<1x128xf32>
    %79 = arith.addf %77, %78 : vector<1x128xf32>
    %80 = arith.negf %79 : vector<1x128xf32>
    %81 = math.exp %80 : vector<1x128xf32>
    %cst_19 = arith.constant 1.000000e+00 : f32
    %82 = vector.broadcast %cst_19 : f32 to vector<1x128xf32>
    %83 = arith.addf %82, %81 : vector<1x128xf32>
    %84 = arith.divf %82, %83 : vector<1x128xf32>
    %85 = vector.extract_strided_slice %67 {offsets = [0, 256], sizes = [1, 128], strides = [1, 1]} : vector<1x384xf32> to vector<1x128xf32>
    %86 = vector.extract_strided_slice %68 {offsets = [0, 256], sizes = [1, 128], strides = [1, 1]} : vector<1x384xf32> to vector<1x128xf32>
    %87 = arith.addf %86, %1 : vector<1x128xf32>
    %88 = arith.mulf %76, %87 : vector<1x128xf32>
    %89 = arith.addf %85, %88 : vector<1x128xf32>
    %90 = math.tanh %89 : vector<1x128xf32>
    %cst_20 = arith.constant 1.000000e+00 : f32
    %91 = vector.broadcast %cst_20 : f32 to vector<1x128xf32>
    %92 = arith.subf %91, %84 : vector<1x128xf32>
    %93 = arith.mulf %92, %90 : vector<1x128xf32>
    %94 = arith.mulf %84, %66 : vector<1x128xf32>
    %95 = arith.addf %93, %94 : vector<1x128xf32>
    %96 = vector.extract_strided_slice %7 {offsets = [3, 0], sizes = [1, 384], strides = [1, 1]} : vector<8x384xf32> to vector<1x384xf32>
    %cst_21 = arith.constant dense<0.000000e+00> : vector<1x384xf32>
    %97 = tpu.matmul %95, %0, %cst_21 {dimension_numbers = #tpu.dot_dimension_numbers<[1], [0], [0], [1], [0, 0, 1, 1], [], []>} : vector<1x128xf32>, vector<128x384xf32>, vector<1x384xf32> -> vector<1x384xf32>
    %98 = vector.extract_strided_slice %96 {offsets = [0, 0], sizes = [1, 128], strides = [1, 1]} : vector<1x384xf32> to vector<1x128xf32>
    %99 = vector.extract_strided_slice %97 {offsets = [0, 0], sizes = [1, 128], strides = [1, 1]} : vector<1x384xf32> to vector<1x128xf32>
    %100 = arith.addf %98, %99 : vector<1x128xf32>
    %101 = arith.negf %100 : vector<1x128xf32>
    %102 = math.exp %101 : vector<1x128xf32>
    %cst_22 = arith.constant 1.000000e+00 : f32
    %103 = vector.broadcast %cst_22 : f32 to vector<1x128xf32>
    %104 = arith.addf %103, %102 : vector<1x128xf32>
    %105 = arith.divf %103, %104 : vector<1x128xf32>
    %106 = vector.extract_strided_slice %96 {offsets = [0, 128], sizes = [1, 128], strides = [1, 1]} : vector<1x384xf32> to vector<1x128xf32>
    %107 = vector.extract_strided_slice %97 {offsets = [0, 128], sizes = [1, 128], strides = [1, 1]} : vector<1x384xf32> to vector<1x128xf32>
    %108 = arith.addf %106, %107 : vector<1x128xf32>
    %109 = arith.negf %108 : vector<1x128xf32>
    %110 = math.exp %109 : vector<1x128xf32>
    %cst_23 = arith.constant 1.000000e+00 : f32
    %111 = vector.broadcast %cst_23 : f32 to vector<1x128xf32>
    %112 = arith.addf %111, %110 : vector<1x128xf32>
    %113 = arith.divf %111, %112 : vector<1x128xf32>
    %114 = vector.extract_strided_slice %96 {offsets = [0, 256], sizes = [1, 128], strides = [1, 1]} : vector<1x384xf32> to vector<1x128xf32>
    %115 = vector.extract_strided_slice %97 {offsets = [0, 256], sizes = [1, 128], strides = [1, 1]} : vector<1x384xf32> to vector<1x128xf32>
    %116 = arith.addf %115, %1 : vector<1x128xf32>
    %117 = arith.mulf %105, %116 : vector<1x128xf32>
    %118 = arith.addf %114, %117 : vector<1x128xf32>
    %119 = math.tanh %118 : vector<1x128xf32>
    %cst_24 = arith.constant 1.000000e+00 : f32
    %120 = vector.broadcast %cst_24 : f32 to vector<1x128xf32>
    %121 = arith.subf %120, %113 : vector<1x128xf32>
    %122 = arith.mulf %121, %119 : vector<1x128xf32>
    %123 = arith.mulf %113, %95 : vector<1x128xf32>
    %124 = arith.addf %122, %123 : vector<1x128xf32>
    %125 = vector.extract_strided_slice %7 {offsets = [4, 0], sizes = [1, 384], strides = [1, 1]} : vector<8x384xf32> to vector<1x384xf32>
    %cst_25 = arith.constant dense<0.000000e+00> : vector<1x384xf32>
    %126 = tpu.matmul %124, %0, %cst_25 {dimension_numbers = #tpu.dot_dimension_numbers<[1], [0], [0], [1], [0, 0, 1, 1], [], []>} : vector<1x128xf32>, vector<128x384xf32>, vector<1x384xf32> -> vector<1x384xf32>
    %127 = vector.extract_strided_slice %125 {offsets = [0, 0], sizes = [1, 128], strides = [1, 1]} : vector<1x384xf32> to vector<1x128xf32>
    %128 = vector.extract_strided_slice %126 {offsets = [0, 0], sizes = [1, 128], strides = [1, 1]} : vector<1x384xf32> to vector<1x128xf32>
    %129 = arith.addf %127, %128 : vector<1x128xf32>
    %130 = arith.negf %129 : vector<1x128xf32>
    %131 = math.exp %130 : vector<1x128xf32>
    %cst_26 = arith.constant 1.000000e+00 : f32
    %132 = vector.broadcast %cst_26 : f32 to vector<1x128xf32>
    %133 = arith.addf %132, %131 : vector<1x128xf32>
    %134 = arith.divf %132, %133 : vector<1x128xf32>
    %135 = vector.extract_strided_slice %125 {offsets = [0, 128], sizes = [1, 128], strides = [1, 1]} : vector<1x384xf32> to vector<1x128xf32>
    %136 = vector.extract_strided_slice %126 {offsets = [0, 128], sizes = [1, 128], strides = [1, 1]} : vector<1x384xf32> to vector<1x128xf32>
    %137 = arith.addf %135, %136 : vector<1x128xf32>
    %138 = arith.negf %137 : vector<1x128xf32>
    %139 = math.exp %138 : vector<1x128xf32>
    %cst_27 = arith.constant 1.000000e+00 : f32
    %140 = vector.broadcast %cst_27 : f32 to vector<1x128xf32>
    %141 = arith.addf %140, %139 : vector<1x128xf32>
    %142 = arith.divf %140, %141 : vector<1x128xf32>
    %143 = vector.extract_strided_slice %125 {offsets = [0, 256], sizes = [1, 128], strides = [1, 1]} : vector<1x384xf32> to vector<1x128xf32>
    %144 = vector.extract_strided_slice %126 {offsets = [0, 256], sizes = [1, 128], strides = [1, 1]} : vector<1x384xf32> to vector<1x128xf32>
    %145 = arith.addf %144, %1 : vector<1x128xf32>
    %146 = arith.mulf %134, %145 : vector<1x128xf32>
    %147 = arith.addf %143, %146 : vector<1x128xf32>
    %148 = math.tanh %147 : vector<1x128xf32>
    %cst_28 = arith.constant 1.000000e+00 : f32
    %149 = vector.broadcast %cst_28 : f32 to vector<1x128xf32>
    %150 = arith.subf %149, %142 : vector<1x128xf32>
    %151 = arith.mulf %150, %148 : vector<1x128xf32>
    %152 = arith.mulf %142, %124 : vector<1x128xf32>
    %153 = arith.addf %151, %152 : vector<1x128xf32>
    %154 = vector.extract_strided_slice %7 {offsets = [5, 0], sizes = [1, 384], strides = [1, 1]} : vector<8x384xf32> to vector<1x384xf32>
    %cst_29 = arith.constant dense<0.000000e+00> : vector<1x384xf32>
    %155 = tpu.matmul %153, %0, %cst_29 {dimension_numbers = #tpu.dot_dimension_numbers<[1], [0], [0], [1], [0, 0, 1, 1], [], []>} : vector<1x128xf32>, vector<128x384xf32>, vector<1x384xf32> -> vector<1x384xf32>
    %156 = vector.extract_strided_slice %154 {offsets = [0, 0], sizes = [1, 128], strides = [1, 1]} : vector<1x384xf32> to vector<1x128xf32>
    %157 = vector.extract_strided_slice %155 {offsets = [0, 0], sizes = [1, 128], strides = [1, 1]} : vector<1x384xf32> to vector<1x128xf32>
    %158 = arith.addf %156, %157 : vector<1x128xf32>
    %159 = arith.negf %158 : vector<1x128xf32>
    %160 = math.exp %159 : vector<1x128xf32>
    %cst_30 = arith.constant 1.000000e+00 : f32
    %161 = vector.broadcast %cst_30 : f32 to vector<1x128xf32>
    %162 = arith.addf %161, %160 : vector<1x128xf32>
    %163 = arith.divf %161, %162 : vector<1x128xf32>
    %164 = vector.extract_strided_slice %154 {offsets = [0, 128], sizes = [1, 128], strides = [1, 1]} : vector<1x384xf32> to vector<1x128xf32>
    %165 = vector.extract_strided_slice %155 {offsets = [0, 128], sizes = [1, 128], strides = [1, 1]} : vector<1x384xf32> to vector<1x128xf32>
    %166 = arith.addf %164, %165 : vector<1x128xf32>
    %167 = arith.negf %166 : vector<1x128xf32>
    %168 = math.exp %167 : vector<1x128xf32>
    %cst_31 = arith.constant 1.000000e+00 : f32
    %169 = vector.broadcast %cst_31 : f32 to vector<1x128xf32>
    %170 = arith.addf %169, %168 : vector<1x128xf32>
    %171 = arith.divf %169, %170 : vector<1x128xf32>
    %172 = vector.extract_strided_slice %154 {offsets = [0, 256], sizes = [1, 128], strides = [1, 1]} : vector<1x384xf32> to vector<1x128xf32>
    %173 = vector.extract_strided_slice %155 {offsets = [0, 256], sizes = [1, 128], strides = [1, 1]} : vector<1x384xf32> to vector<1x128xf32>
    %174 = arith.addf %173, %1 : vector<1x128xf32>
    %175 = arith.mulf %163, %174 : vector<1x128xf32>
    %176 = arith.addf %172, %175 : vector<1x128xf32>
    %177 = math.tanh %176 : vector<1x128xf32>
    %cst_32 = arith.constant 1.000000e+00 : f32
    %178 = vector.broadcast %cst_32 : f32 to vector<1x128xf32>
    %179 = arith.subf %178, %171 : vector<1x128xf32>
    %180 = arith.mulf %179, %177 : vector<1x128xf32>
    %181 = arith.mulf %171, %153 : vector<1x128xf32>
    %182 = arith.addf %180, %181 : vector<1x128xf32>
    %183 = vector.extract_strided_slice %7 {offsets = [6, 0], sizes = [1, 384], strides = [1, 1]} : vector<8x384xf32> to vector<1x384xf32>
    %cst_33 = arith.constant dense<0.000000e+00> : vector<1x384xf32>
    %184 = tpu.matmul %182, %0, %cst_33 {dimension_numbers = #tpu.dot_dimension_numbers<[1], [0], [0], [1], [0, 0, 1, 1], [], []>} : vector<1x128xf32>, vector<128x384xf32>, vector<1x384xf32> -> vector<1x384xf32>
    %185 = vector.extract_strided_slice %183 {offsets = [0, 0], sizes = [1, 128], strides = [1, 1]} : vector<1x384xf32> to vector<1x128xf32>
    %186 = vector.extract_strided_slice %184 {offsets = [0, 0], sizes = [1, 128], strides = [1, 1]} : vector<1x384xf32> to vector<1x128xf32>
    %187 = arith.addf %185, %186 : vector<1x128xf32>
    %188 = arith.negf %187 : vector<1x128xf32>
    %189 = math.exp %188 : vector<1x128xf32>
    %cst_34 = arith.constant 1.000000e+00 : f32
    %190 = vector.broadcast %cst_34 : f32 to vector<1x128xf32>
    %191 = arith.addf %190, %189 : vector<1x128xf32>
    %192 = arith.divf %190, %191 : vector<1x128xf32>
    %193 = vector.extract_strided_slice %183 {offsets = [0, 128], sizes = [1, 128], strides = [1, 1]} : vector<1x384xf32> to vector<1x128xf32>
    %194 = vector.extract_strided_slice %184 {offsets = [0, 128], sizes = [1, 128], strides = [1, 1]} : vector<1x384xf32> to vector<1x128xf32>
    %195 = arith.addf %193, %194 : vector<1x128xf32>
    %196 = arith.negf %195 : vector<1x128xf32>
    %197 = math.exp %196 : vector<1x128xf32>
    %cst_35 = arith.constant 1.000000e+00 : f32
    %198 = vector.broadcast %cst_35 : f32 to vector<1x128xf32>
    %199 = arith.addf %198, %197 : vector<1x128xf32>
    %200 = arith.divf %198, %199 : vector<1x128xf32>
    %201 = vector.extract_strided_slice %183 {offsets = [0, 256], sizes = [1, 128], strides = [1, 1]} : vector<1x384xf32> to vector<1x128xf32>
    %202 = vector.extract_strided_slice %184 {offsets = [0, 256], sizes = [1, 128], strides = [1, 1]} : vector<1x384xf32> to vector<1x128xf32>
    %203 = arith.addf %202, %1 : vector<1x128xf32>
    %204 = arith.mulf %192, %203 : vector<1x128xf32>
    %205 = arith.addf %201, %204 : vector<1x128xf32>
    %206 = math.tanh %205 : vector<1x128xf32>
    %cst_36 = arith.constant 1.000000e+00 : f32
    %207 = vector.broadcast %cst_36 : f32 to vector<1x128xf32>
    %208 = arith.subf %207, %200 : vector<1x128xf32>
    %209 = arith.mulf %208, %206 : vector<1x128xf32>
    %210 = arith.mulf %200, %182 : vector<1x128xf32>
    %211 = arith.addf %209, %210 : vector<1x128xf32>
    %212 = vector.extract_strided_slice %7 {offsets = [7, 0], sizes = [1, 384], strides = [1, 1]} : vector<8x384xf32> to vector<1x384xf32>
    %cst_37 = arith.constant dense<0.000000e+00> : vector<1x384xf32>
    %213 = tpu.matmul %211, %0, %cst_37 {dimension_numbers = #tpu.dot_dimension_numbers<[1], [0], [0], [1], [0, 0, 1, 1], [], []>} : vector<1x128xf32>, vector<128x384xf32>, vector<1x384xf32> -> vector<1x384xf32>
    %214 = vector.extract_strided_slice %212 {offsets = [0, 0], sizes = [1, 128], strides = [1, 1]} : vector<1x384xf32> to vector<1x128xf32>
    %215 = vector.extract_strided_slice %213 {offsets = [0, 0], sizes = [1, 128], strides = [1, 1]} : vector<1x384xf32> to vector<1x128xf32>
    %216 = arith.addf %214, %215 : vector<1x128xf32>
    %217 = arith.negf %216 : vector<1x128xf32>
    %218 = math.exp %217 : vector<1x128xf32>
    %cst_38 = arith.constant 1.000000e+00 : f32
    %219 = vector.broadcast %cst_38 : f32 to vector<1x128xf32>
    %220 = arith.addf %219, %218 : vector<1x128xf32>
    %221 = arith.divf %219, %220 : vector<1x128xf32>
    %222 = vector.extract_strided_slice %212 {offsets = [0, 128], sizes = [1, 128], strides = [1, 1]} : vector<1x384xf32> to vector<1x128xf32>
    %223 = vector.extract_strided_slice %213 {offsets = [0, 128], sizes = [1, 128], strides = [1, 1]} : vector<1x384xf32> to vector<1x128xf32>
    %224 = arith.addf %222, %223 : vector<1x128xf32>
    %225 = arith.negf %224 : vector<1x128xf32>
    %226 = math.exp %225 : vector<1x128xf32>
    %cst_39 = arith.constant 1.000000e+00 : f32
    %227 = vector.broadcast %cst_39 : f32 to vector<1x128xf32>
    %228 = arith.addf %227, %226 : vector<1x128xf32>
    %229 = arith.divf %227, %228 : vector<1x128xf32>
    %230 = vector.extract_strided_slice %212 {offsets = [0, 256], sizes = [1, 128], strides = [1, 1]} : vector<1x384xf32> to vector<1x128xf32>
    %231 = vector.extract_strided_slice %213 {offsets = [0, 256], sizes = [1, 128], strides = [1, 1]} : vector<1x384xf32> to vector<1x128xf32>
    %232 = arith.addf %231, %1 : vector<1x128xf32>
    %233 = arith.mulf %221, %232 : vector<1x128xf32>
    %234 = arith.addf %230, %233 : vector<1x128xf32>
    %235 = math.tanh %234 : vector<1x128xf32>
    %cst_40 = arith.constant 1.000000e+00 : f32
    %236 = vector.broadcast %cst_40 : f32 to vector<1x128xf32>
    %237 = arith.subf %236, %229 : vector<1x128xf32>
    %238 = arith.mulf %237, %235 : vector<1x128xf32>
    %239 = arith.mulf %229, %211 : vector<1x128xf32>
    %240 = arith.addf %238, %239 : vector<1x128xf32>
    %c0_41 = arith.constant 0 : index
    %c0_42 = arith.constant 0 : index
    %241 = vector.load %arg8[%c0_41, %c0_42] : memref<1x128xf32, #tpu.memory_space<vmem>>, vector<1x128xf32>
    tpu.vector_store %arg8[%c0_41, %c0_42], %240 {strides = array<i32>} : memref<1x128xf32, #tpu.memory_space<vmem>>, vector<1x128xf32>,
    %c0_43 = arith.constant 0 : index
    %c0_44 = arith.constant 0 : index
    %242 = vector.load %arg5[%c0_43, %c0_44] : memref<128x128xf32, #tpu.memory_space<vmem>>, vector<128x128xf32>
    %cst_45 = arith.constant dense<0.000000e+00> : vector<1x128xf32>
    %243 = tpu.matmul %240, %242, %cst_45 {dimension_numbers = #tpu.dot_dimension_numbers<[1], [0], [0], [1], [0, 0, 1, 1], [], []>} : vector<1x128xf32>, vector<128x128xf32>, vector<1x128xf32> -> vector<1x128xf32>
    %c0_46 = arith.constant 0 : index
    %c0_47 = arith.constant 0 : index
    %244 = vector.load %arg6[%c0_46, %c0_47] : memref<1x128xf32, #tpu.memory_space<vmem>>, vector<1x128xf32>
    %245 = arith.addf %243, %244 : vector<1x128xf32>
    %cst_48 = arith.constant dense<0xFF800000> : vector<1xf32>
    %246 = vector.multi_reduction <maximumf>, %245, %cst_48 [1] : vector<1x128xf32> to vector<1xf32>
    %247 = vector.shape_cast %246 : vector<1xf32> to vector<1x1xf32>
    %248 = vector.broadcast %247 : vector<1x1xf32> to vector<1x128xf32>
    %249 = arith.subf %245, %248 : vector<1x128xf32>
    %250 = math.exp %249 : vector<1x128xf32>
    %cst_49 = arith.constant dense<0.000000e+00> : vector<1xf32>
    %251 = vector.multi_reduction <add>, %250, %cst_49 [1] : vector<1x128xf32> to vector<1xf32>
    %252 = vector.shape_cast %251 : vector<1xf32> to vector<1x1xf32>
    %253 = math.log %252 : vector<1x1xf32>
    %254 = vector.broadcast %253 : vector<1x1xf32> to vector<1x128xf32>
    %255 = arith.subf %249, %254 : vector<1x128xf32>
    %c0_50 = arith.constant 0 : index
    %c0_51 = arith.constant 0 : index
    %256 = vector.load %arg7[%c0_50, %c0_51] : memref<1x128xf32, #tpu.memory_space<vmem>>, vector<1x128xf32>
    tpu.vector_store %arg7[%c0_50, %c0_51], %255 {strides = array<i32>} : memref<1x128xf32, #tpu.memory_space<vmem>>, vector<1x128xf32>,
    return
  }
}

</mosaic_0001>

<llo_original>
// kernel: tpu_custom_call.1
$region0: #{tpu_custom_call.1}
  #allocation0 [shape = 'u32[]', space=smem, size = 0x4, offset = 0x4, fixed_abs, tag = 'smem constant byte address 0x4 - core index']
  #allocation1 [shape = 'u32[72,128]{1,0:T(1,128)}', space=vmem, size = 0x9000, scoped, tag = 'internal scratch']
  %s0 = inlined_call_operand.hbm [shape: f32[8,16], index: 0, kind: input, shape index: {}]
  %s1 = inlined_call_operand.hbm [shape: f32[16,384], index: 1, kind: input, shape index: {}]
  %s2 = inlined_call_operand.hbm [shape: f32[128,384], index: 2, kind: input, shape index: {}]
  %s3 = inlined_call_operand.hbm [shape: f32[2,384], index: 3, kind: input, shape index: {}]
  %s4 = inlined_call_operand.vmem [shape: f32[1,128], index: 4, kind: input, shape index: {}]
  %s5 = inlined_call_operand.hbm [shape: f32[128,128], index: 5, kind: input, shape index: {}]
  %s6 = inlined_call_operand.vmem [shape: f32[1,128], index: 6, kind: input, shape index: {}]
  %s7 = inlined_call_operand.hbm [shape: f32[1,128], index: 7, kind: output, shape index: {0}]
  %s8 = inlined_call_operand.hbm [shape: f32[1,128], index: 8, kind: output, shape index: {1}]
  %9 = xla_tuple %s7, %s8
  %s10 = sld [smem:[#allocation0]]
  $region66: #{tpu_custom_call.1} parent=0
    _
  %s12 = ssub.s32 1, %s10
  %s13 = scalar_select 0, %s12, %s10
  $region1: #{tpu_custom_call.1} parent=0
    #allocation2 [shape = 'u8[4096]{0}', space=vmem, size = 0x1000, scoped, tag = 'input window, operand 0, single buffered']
    #allocation3 [shape = 's32[1]{0}', space=sflag, size = 0x4, scoped, tag = 'scoped memory for tpu_custom_call.1']
    #allocation4 [shape = 's32[1]{0}', space=sflag, size = 0x4, scoped, tag = 'scoped memory for tpu_custom_call.1']
    #allocation5 [shape = 'u8[24576]{0}', space=vmem, size = 0x6000, scoped, tag = 'input window, operand 1, single buffered']
    #allocation6 [shape = 's32[1]{0}', space=sflag, size = 0x4, scoped, tag = 'scoped memory for tpu_custom_call.1']
    #allocation7 [shape = 'u8[196608]{0}', space=vmem, size = 0x30000, scoped, tag = 'input window, operand 2, single buffered']
    #allocation8 [shape = 'u8[3072]{0}', space=vmem, size = 0xc00, scoped, tag = 'input window, operand 3, single buffered']
    #allocation9 [shape = 's32[1]{0}', space=sflag, size = 0x4, scoped, tag = 'scoped memory for tpu_custom_call.1']
    #allocation10 [shape = 'u8[65536]{0}', space=vmem, size = 0x10000, scoped, tag = 'input window, operand 5, single buffered']
    #allocation11 [shape = 'u8[512]{0}', space=vmem, size = 0x400, scoped, tag = 'output window, operand 0, single buffered']
    #allocation12 [shape = 'u8[512]{0}', space=vmem, size = 0x400, scoped, tag = 'output window, operand 1, single buffered']
    #allocation13 [shape = 's32[1]{0}', space=sflag, size = 0x4, scoped, tag = 'scoped memory for tpu_custom_call.1']
    %14 = vsyncpa [#allocation3], 0
    %15 = vsyncpa [#allocation6], 0
    %16 = vsyncpa [#allocation9], 0
    %17 = vsyncpa [#allocation4], 0
    %18 = vsyncpa [#allocation13], 0
    // Predicated region
    $region2: #{tpu_custom_call.1} parent=1 // pred_check
      _
    $region3: #{tpu_custom_call.1} parent=1 // pred_check_branch
      %20 = sbr.rel (0) target = $region5
    $region4: #{tpu_custom_call.1} parent=1 // pred_region
      %22 = vsyncadd [#allocation3], 0
      %s24 = sshll.u32 %s0, 4
      %s25 = int_to_ptr.hbm [resolvable:$true] %s24
      %s26 = sshll.u32 [#allocation2], 4
      %s27 = int_to_ptr.vmem [resolvable:$true] %s26
      %29 = dma.hbm_to_vmem [thread:$0]  %s25, 128, %s27, [#allocation3]
    $region5: #{tpu_custom_call.1} parent=1 // pred_fallthru
      _
    // Predicated region
    $region6: #{tpu_custom_call.1} parent=1 // pred_check
      _
    $region7: #{tpu_custom_call.1} parent=1 // pred_check_branch
      %31 = sbr.rel (0) target = $region9
    $region8: #{tpu_custom_call.1} parent=1 // pred_region
      %33 = vsyncadd [#allocation6], 0
      %s34 = sshll.u32 %s1, 4
      %s35 = int_to_ptr.hbm [resolvable:$true] %s34
      %s36 = sshll.u32 [#allocation5], 4
      %s37 = int_to_ptr.vmem [resolvable:$true] %s36
      %42 = dma.hbm_to_vmem [thread:$0]  %s35, 768, %s37, [#allocation6], 384, 384, 24
    $region9: #{tpu_custom_call.1} parent=1 // pred_fallthru
      _
    // Predicated region
    $region10: #{tpu_custom_call.1} parent=1 // pred_check
      _
    $region11: #{tpu_custom_call.1} parent=1 // pred_check_branch
      %44 = sbr.rel (0) target = $region13
    $region12: #{tpu_custom_call.1} parent=1 // pred_region
      %46 = vsyncadd [#allocation6], 0
      %s47 = sshll.u32 %s2, 4
      %s48 = int_to_ptr.hbm [resolvable:$true] %s47
      %s49 = sshll.u32 [#allocation7], 4
      %s50 = int_to_ptr.vmem [resolvable:$true] %s49
      %55 = dma.hbm_to_vmem [thread:$0]  %s48, 6144, %s50, [#allocation6], 384, 384, 24
    $region13: #{tpu_custom_call.1} parent=1 // pred_fallthru
      _
    // Predicated region
    $region14: #{tpu_custom_call.1} parent=1 // pred_check
      _
    $region15: #{tpu_custom_call.1} parent=1 // pred_check_branch
      %57 = sbr.rel (0) target = $region17
    $region16: #{tpu_custom_call.1} parent=1 // pred_region
      %59 = vsyncadd [#allocation9], 0
      %s61 = sshll.u32 %s3, 4
      %s62 = int_to_ptr.hbm [resolvable:$true] %s61
      %s63 = sshll.u32 [#allocation8], 4
      %s64 = int_to_ptr.vmem [resolvable:$true] %s63
      %66 = dma.hbm_to_vmem [thread:$0]  %s62, 96, %s64, [#allocation9]
    $region17: #{tpu_custom_call.1} parent=1 // pred_fallthru
      _
    // Predicated region
    $region18: #{tpu_custom_call.1} parent=1 // pred_check
      _
    $region19: #{tpu_custom_call.1} parent=1 // pred_check_branch
      %68 = sbr.rel (0) target = $region21
    $region20: #{tpu_custom_call.1} parent=1 // pred_region
      _
    $region21: #{tpu_custom_call.1} parent=1 // pred_fallthru
      _
    // Predicated region
    $region22: #{tpu_custom_call.1} parent=1 // pred_check
      _
    $region23: #{tpu_custom_call.1} parent=1 // pred_check_branch
      %70 = sbr.rel (0) target = $region25
    $region24: #{tpu_custom_call.1} parent=1 // pred_region
      %72 = vsyncadd [#allocation9], 0
      %s73 = sshll.u32 %s5, 4
      %s74 = int_to_ptr.hbm [resolvable:$true] %s73
      %s75 = sshll.u32 [#allocation10], 4
      %s76 = int_to_ptr.vmem [resolvable:$true] %s75
      %81 = dma.hbm_to_vmem [thread:$0]  %s74, 2048, %s76, [#allocation9], 128, 128, 8
    $region25: #{tpu_custom_call.1} parent=1 // pred_fallthru
      _
    // Predicated region
    $region26: #{tpu_custom_call.1} parent=1 // pred_check
      _
    $region27: #{tpu_custom_call.1} parent=1 // pred_check_branch
      %83 = sbr.rel (0) target = $region29
    $region28: #{tpu_custom_call.1} parent=1 // pred_region
      _
    $region29: #{tpu_custom_call.1} parent=1 // pred_fallthru
      _
    // Predicated region
    $region30: #{tpu_custom_call.1} parent=1 // pred_check
      _
    $region31: #{tpu_custom_call.1} parent=1 // pred_check_branch
      %85 = sbr.rel (0) target = $region33
    $region32: #{tpu_custom_call.1} parent=1 // pred_region
      %87 = dma.done [#allocation3], 128
    $region33: #{tpu_custom_call.1} parent=1 // pred_fallthru
      _
    // Predicated region
    $region34: #{tpu_custom_call.1} parent=1 // pred_check
      _
    $region35: #{tpu_custom_call.1} parent=1 // pred_check_branch
      %89 = sbr.rel (0) target = $region37
    $region36: #{tpu_custom_call.1} parent=1 // pred_region
      %91 = dma.done [#allocation6], 768
    $region37: #{tpu_custom_call.1} parent=1 // pred_fallthru
      _
    // Predicated region
    $region38: #{tpu_custom_call.1} parent=1 // pred_check
      _
    $region39: #{tpu_custom_call.1} parent=1 // pred_check_branch
      %93 = sbr.rel (0) target = $region41
    $region40: #{tpu_custom_call.1} parent=1 // pred_region
      %95 = dma.done [#allocation6], 6144
    $region41: #{tpu_custom_call.1} parent=1 // pred_fallthru
      _
    // Predicated region
    $region42: #{tpu_custom_call.1} parent=1 // pred_check
      _
    $region43: #{tpu_custom_call.1} parent=1 // pred_check_branch
      %97 = sbr.rel (0) target = $region45
    $region44: #{tpu_custom_call.1} parent=1 // pred_region
      %99 = dma.done [#allocation9], 96
    $region45: #{tpu_custom_call.1} parent=1 // pred_fallthru
      _
    // Predicated region
    $region46: #{tpu_custom_call.1} parent=1 // pred_check
      _
    $region47: #{tpu_custom_call.1} parent=1 // pred_check_branch
      %101 = sbr.rel (0) target = $region49
    $region48: #{tpu_custom_call.1} parent=1 // pred_region
      %103 = dma.done [#allocation9], 2048
    $region49: #{tpu_custom_call.1} parent=1 // pred_fallthru
      _
    %v104 = vld [vmem:[#allocation7] sm:$0xff]
    %v105 = vld [vmem:[#allocation7 + $0x8] sm:$0xff]
    %v106 = vld [vmem:[#allocation7 + $0x10] sm:$0xff]
    %v107 = vld [vmem:[#allocation7 + $0x18] sm:$0xff]
    %v108 = vld [vmem:[#allocation7 + $0x20] sm:$0xff]
    %v109 = vld [vmem:[#allocation7 + $0x28] sm:$0xff]
    %v110 = vld [vmem:[#allocation7 + $0x30] sm:$0xff]
    %v111 = vld [vmem:[#allocation7 + $0x38] sm:$0xff]
    %v112 = vld [vmem:[#allocation7 + $0x40] sm:$0xff]
    %v113 = vld [vmem:[#allocation7 + $0x48] sm:$0xff]
    %v114 = vld [vmem:[#allocation7 + $0x50] sm:$0xff]
    %v115 = vld [vmem:[#allocation7 + $0x58] sm:$0xff]
    %v116 = vld [vmem:[#allocation7 + $0x60] sm:$0xff]
    %v117 = vld [vmem:[#allocation7 + $0x68] sm:$0xff]
    %v118 = vld [vmem:[#allocation7 + $0x70] sm:$0xff]
    %v119 = vld [vmem:[#allocation7 + $0x78] sm:$0xff]
    %v120 = vld [vmem:[#allocation7 + $0x80] sm:$0xff]
    %v121 = vld [vmem:[#allocation7 + $0x88] sm:$0xff]
    %v122 = vld [vmem:[#allocation7 + $0x90] sm:$0xff]
    %v123 = vld [vmem:[#allocation7 + $0x98] sm:$0xff]
    %v124 = vld [vmem:[#allocation7 + $0xa0] sm:$0xff]
    %v125 = vld [vmem:[#allocation7 + $0xa8] sm:$0xff]
    %v126 = vld [vmem:[#allocation7 + $0xb0] sm:$0xff]
    %v127 = vld [vmem:[#allocation7 + $0xb8] sm:$0xff]
    %v128 = vld [vmem:[#allocation7 + $0xc0] sm:$0xff]
    %v129 = vld [vmem:[#allocation7 + $0xc8] sm:$0xff]
    %v130 = vld [vmem:[#allocation7 + $0xd0] sm:$0xff]
    %v131 = vld [vmem:[#allocation7 + $0xd8] sm:$0xff]
    %v132 = vld [vmem:[#allocation7 + $0xe0] sm:$0xff]
    %v133 = vld [vmem:[#allocation7 + $0xe8] sm:$0xff]
    %v134 = vld [vmem:[#allocation7 + $0xf0] sm:$0xff]
    %v135 = vld [vmem:[#allocation7 + $0xf8] sm:$0xff]
    %v136 = vld [vmem:[#allocation7 + $0x100] sm:$0xff]
    %v137 = vld [vmem:[#allocation7 + $0x108] sm:$0xff]
    %v138 = vld [vmem:[#allocation7 + $0x110] sm:$0xff]
    %v139 = vld [vmem:[#allocation7 + $0x118] sm:$0xff]
    %v140 = vld [vmem:[#allocation7 + $0x120] sm:$0xff]
    %v141 = vld [vmem:[#allocation7 + $0x128] sm:$0xff]
    %v142 = vld [vmem:[#allocation7 + $0x130] sm:$0xff]
    %v143 = vld [vmem:[#allocation7 + $0x138] sm:$0xff]
    %v144 = vld [vmem:[#allocation7 + $0x140] sm:$0xff]
    %v145 = vld [vmem:[#allocation7 + $0x148] sm:$0xff]
    %v146 = vld [vmem:[#allocation7 + $0x150] sm:$0xff]
    %v147 = vld [vmem:[#allocation7 + $0x158] sm:$0xff]
    %v148 = vld [vmem:[#allocation7 + $0x160] sm:$0xff]
    %v149 = vld [vmem:[#allocation7 + $0x168] sm:$0xff]
    %v150 = vld [vmem:[#allocation7 + $0x170] sm:$0xff]
    %v151 = vld [vmem:[#allocation7 + $0x178] sm:$0xff]
    %v152 = vld [vmem:[#allocation8 + $0x5] sm:$0x1]
    %v153 = vld [vmem:[#allocation2] sm:$0xff]
    %v154 = vld [vmem:[#allocation5] sm:$0xff]
    %v155 = vld [vmem:[#allocation5 + $0x8] sm:$0xff]
    %v156 = vld [vmem:[#allocation5 + $0x10] sm:$0xff]
    %v157 = vld [vmem:[#allocation5 + $0x18] sm:$0xff]
    %v158 = vld [vmem:[#allocation5 + $0x20] sm:$0xff]
    %v159 = vld [vmem:[#allocation5 + $0x28] sm:$0xff]
    %v160 = vld [vmem:[#allocation8] ss:$2 sm:$0x7]
    %v162 = vperm.slane %v160, 0
    %v163 = vperm.slane %v160, 1
    %v164 = vperm.slane %v160, 2
    %vm168 = vcmask 130048
    %v170 = vsel %vm168, %v153, 0
    %172 = vmatpush.msra.mxu0 0.0
    %173 = vmatpush.msra.mxu0 0.0
    %174 = vmatpush.msra.mxu0 0.0
    %175 = vmatpush.msra.mxu0 0.0
    %176 = vmatpush.msra.mxu0 0.0
    %177 = vmatpush.msra.mxu0 0.0
    %178 = vmatpush.msra.mxu0 0.0
    %179 = vmatpush.msra.mxu0 0.0
    %180 = vmatpush.msra.mxu0 0.0
    %181 = vmatpush.msra.mxu0 0.0
    %182 = vmatpush.msra.mxu0 0.0
    %183 = vmatpush.msra.mxu0 0.0
    %184 = vmatpush.msra.mxu0 0.0
    %185 = vmatpush.msra.mxu0 0.0
    %186 = vmatpush.msra.mxu0 %v157
    %187 = vmatpush.msra.mxu0 %v154
    %188 = vmatmul.f32.gmra.mxu0 %v170
    %v189 = vpop.f32.mrf.mxu0
    %v190 = vadd.f32 %v162, %v189
    %191 = vdwg.mxu0
    %192 = vmatpush.msra.mxu0 0.0
    %193 = vmatpush.msra.mxu0 0.0
    %194 = vmatpush.msra.mxu0 0.0
    %195 = vmatpush.msra.mxu0 0.0
    %196 = vmatpush.msra.mxu0 0.0
    %197 = vmatpush.msra.mxu0 0.0
    %198 = vmatpush.msra.mxu0 0.0
    %199 = vmatpush.msra.mxu0 0.0
    %200 = vmatpush.msra.mxu0 0.0
    %201 = vmatpush.msra.mxu0 0.0
    %202 = vmatpush.msra.mxu0 0.0
    %203 = vmatpush.msra.mxu0 0.0
    %204 = vmatpush.msra.mxu0 0.0
    %205 = vmatpush.msra.mxu0 0.0
    %206 = vmatpush.msra.mxu0 %v158
    %207 = vmatpush.msra.mxu0 %v155
    %208 = vmatmul.f32.gmra.mxu0 %v170
    %v209 = vpop.f32.mrf.mxu0
    %v210 = vadd.f32 %v163, %v209
    %211 = vdwg.mxu0
    %212 = vmatpush.msra.mxu0 0.0
    %213 = vmatpush.msra.mxu0 0.0
    %214 = vmatpush.msra.mxu0 0.0
    %215 = vmatpush.msra.mxu0 0.0
    %216 = vmatpush.msra.mxu0 0.0
    %217 = vmatpush.msra.mxu0 0.0
    %218 = vmatpush.msra.mxu0 0.0
    %219 = vmatpush.msra.mxu0 0.0
    %220 = vmatpush.msra.mxu0 0.0
    %221 = vmatpush.msra.mxu0 0.0
    %222 = vmatpush.msra.mxu0 0.0
    %223 = vmatpush.msra.mxu0 0.0
    %224 = vmatpush.msra.mxu0 0.0
    %225 = vmatpush.msra.mxu0 0.0
    %226 = vmatpush.msra.mxu0 %v159
    %227 = vmatpush.msra.mxu0 %v156
    %228 = vmatmul.f32.gmra.mxu0 %v170
    %v229 = vpop.f32.mrf.mxu0
    %v230 = vadd.f32 %v164, %v229
    %231 = vdwg.mxu0
    %v232 = vld [vmem:[%s4] sm:$0x1]
    %233 = vmatpush.msra.mxu0 %v149
    %234 = vmatpush.msra.mxu0 %v146
    %235 = vmatpush.msra.mxu0 %v143
    %236 = vmatpush.msra.mxu0 %v140
    %237 = vmatpush.msra.mxu0 %v137
    %238 = vmatpush.msra.mxu0 %v134
    %239 = vmatpush.msra.mxu0 %v131
    %240 = vmatpush.msra.mxu0 %v128
    %241 = vmatpush.msra.mxu0 %v125
    %242 = vmatpush.msra.mxu0 %v122
    %243 = vmatpush.msra.mxu0 %v119
    %244 = vmatpush.msra.mxu0 %v116
    %245 = vmatpush.msra.mxu0 %v113
    %246 = vmatpush.msra.mxu0 %v110
    %247 = vmatpush.msra.mxu0 %v107
    %248 = vmatpush.msra.mxu0 %v104
    %249 = vmatmul.f32.gmra.mxu0 %v232
    %v250 = vpop.f32.mrf.mxu0
    %v251 = vadd.f32 0.0, %v250
    %252 = vdwg.mxu0
    %253 = vmatpush.msra.mxu0 %v150
    %254 = vmatpush.msra.mxu0 %v147
    %255 = vmatpush.msra.mxu0 %v144
    %256 = vmatpush.msra.mxu0 %v141
    %257 = vmatpush.msra.mxu0 %v138
    %258 = vmatpush.msra.mxu0 %v135
    %259 = vmatpush.msra.mxu0 %v132
    %260 = vmatpush.msra.mxu0 %v129
    %261 = vmatpush.msra.mxu0 %v126
    %262 = vmatpush.msra.mxu0 %v123
    %263 = vmatpush.msra.mxu0 %v120
    %264 = vmatpush.msra.mxu0 %v117
    %265 = vmatpush.msra.mxu0 %v114
    %266 = vmatpush.msra.mxu0 %v111
    %267 = vmatpush.msra.mxu0 %v108
    %268 = vmatpush.msra.mxu0 %v105
    %269 = vmatmul.f32.gmra.mxu0 %v232
    %v270 = vpop.f32.mrf.mxu0
    %v271 = vadd.f32 0.0, %v270
    %272 = vdwg.mxu0
    %273 = vmatpush.msra.mxu0 %v151
    %274 = vmatpush.msra.mxu0 %v148
    %275 = vmatpush.msra.mxu0 %v145
    %276 = vmatpush.msra.mxu0 %v142
    %277 = vmatpush.msra.mxu0 %v139
    %278 = vmatpush.msra.mxu0 %v136
    %279 = vmatpush.msra.mxu0 %v133
    %280 = vmatpush.msra.mxu0 %v130
    %281 = vmatpush.msra.mxu0 %v127
    %282 = vmatpush.msra.mxu0 %v124
    %283 = vmatpush.msra.mxu0 %v121
    %284 = vmatpush.msra.mxu0 %v118
    %285 = vmatpush.msra.mxu0 %v115
    %286 = vmatpush.msra.mxu0 %v112
    %287 = vmatpush.msra.mxu0 %v109
    %288 = vmatpush.msra.mxu0 %v106
    %289 = vmatmul.f32.gmra.mxu0 %v232
    %v290 = vpop.f32.mrf.mxu0
    %v291 = vadd.f32 0.0, %v290
    %292 = vdwg.mxu0
    %v293 = vadd.f32 %v190, %v251
    %v294 = vxor.u32 %v293, 2147483648
    %v295 = vmul.f32 %v294, 1.442695
    %v296 = vpow.pop %v295
    %v297 = vadd.f32 %v296, 1.0
    %v298 = vrcp.pop %v297
    %v299 = vmul.f32 %v297, %v298
    %v300 = vsub.f32 1.0, %v299
    %v301 = vmul.f32 %v298, %v300
    %v302 = vadd.f32 %v298, %v301
    %vm303 = vweird.f32 %v297
    %vm304 = vweird.f32 %v298
    %vm305 = vmor %vm303, %vm304
    %v306 = vsel %vm305, %v298, %v302
    %v307 = vand.u32 2147483647, %v297
    %vm308 = vcmp.eq.f32.partialorder %v307, 8.507059e+37
    %v309 = vand.u32 %v297, 2147483648
    %v310 = vor.u32 1.1754944e-38, %v309
    %v311 = vsel %vm308, %v310, %v306
    %v312 = vmul.f32 1.0, %v311
    %v313 = vadd.f32 %v210, %v271
    %v314 = vxor.u32 %v313, 2147483648
    %v315 = vmul.f32 %v314, 1.442695
    %v316 = vpow.pop %v315
    %v317 = vadd.f32 %v316, 1.0
    %v318 = vrcp.pop %v317
    %v319 = vmul.f32 %v317, %v318
    %v320 = vsub.f32 1.0, %v319
    %v321 = vmul.f32 %v318, %v320
    %v322 = vadd.f32 %v318, %v321
    %vm323 = vweird.f32 %v317
    %vm324 = vweird.f32 %v318
    %vm325 = vmor %vm323, %vm324
    %v326 = vsel %vm325, %v318, %v322
    %v327 = vand.u32 2147483647, %v317
    %vm328 = vcmp.eq.f32.partialorder %v327, 8.507059e+37
    %v329 = vand.u32 %v317, 2147483648
    %v330 = vor.u32 1.1754944e-38, %v329
    %v331 = vsel %vm328, %v330, %v326
    %v332 = vmul.f32 1.0, %v331
    %v333 = vadd.f32 %v291, %v152
    %v334 = vmul.f32 %v312, %v333
    %v335 = vadd.f32 %v230, %v334
    %v336 = vtanh.pop %v335
    %v337 = vsub.f32 1.0, %v332
    %v338 = vmul.f32 %v337, %v336
    %v339 = vmul.f32 %v332, %v232
    %v340 = vadd.f32 %v338, %v339
    %341 = vmatpush.msra.mxu0 %v149
    %342 = vmatpush.msra.mxu0 %v146
    %343 = vmatpush.msra.mxu0 %v143
    %344 = vmatpush.msra.mxu0 %v140
    %345 = vmatpush.msra.mxu0 %v137
    %346 = vmatpush.msra.mxu0 %v134
    %347 = vmatpush.msra.mxu0 %v131
    %348 = vmatpush.msra.mxu0 %v128
    %349 = vmatpush.msra.mxu0 %v125
    %350 = vmatpush.msra.mxu0 %v122
    %351 = vmatpush.msra.mxu0 %v119
    %352 = vmatpush.msra.mxu0 %v116
    %353 = vmatpush.msra.mxu0 %v113
    %354 = vmatpush.msra.mxu0 %v110
    %355 = vmatpush.msra.mxu0 %v107
    %356 = vmatpush.msra.mxu0 %v104
    %357 = vmatmul.f32.gmra.mxu0 %v340
    %v358 = vpop.f32.mrf.mxu0
    %v359 = vadd.f32 0.0, %v358
    %360 = vdwg.mxu0
    %361 = vmatpush.msra.mxu0 %v150
    %362 = vmatpush.msra.mxu0 %v147
    %363 = vmatpush.msra.mxu0 %v144
    %364 = vmatpush.msra.mxu0 %v141
    %365 = vmatpush.msra.mxu0 %v138
    %366 = vmatpush.msra.mxu0 %v135
    %367 = vmatpush.msra.mxu0 %v132
    %368 = vmatpush.msra.mxu0 %v129
    %369 = vmatpush.msra.mxu0 %v126
    %370 = vmatpush.msra.mxu0 %v123
    %371 = vmatpush.msra.mxu0 %v120
    %372 = vmatpush.msra.mxu0 %v117
    %373 = vmatpush.msra.mxu0 %v114
    %374 = vmatpush.msra.mxu0 %v111
    %375 = vmatpush.msra.mxu0 %v108
    %376 = vmatpush.msra.mxu0 %v105
    %377 = vmatmul.f32.gmra.mxu0 %v340
    %v378 = vpop.f32.mrf.mxu0
    %v379 = vadd.f32 0.0, %v378
    %380 = vdwg.mxu0
    %381 = vmatpush.msra.mxu0 %v151
    %382 = vmatpush.msra.mxu0 %v148
    %383 = vmatpush.msra.mxu0 %v145
    %384 = vmatpush.msra.mxu0 %v142
    %385 = vmatpush.msra.mxu0 %v139
    %386 = vmatpush.msra.mxu0 %v136
    %387 = vmatpush.msra.mxu0 %v133
    %388 = vmatpush.msra.mxu0 %v130
    %389 = vmatpush.msra.mxu0 %v127
    %390 = vmatpush.msra.mxu0 %v124
    %391 = vmatpush.msra.mxu0 %v121
    %392 = vmatpush.msra.mxu0 %v118
    %393 = vmatpush.msra.mxu0 %v115
    %394 = vmatpush.msra.mxu0 %v112
    %395 = vmatpush.msra.mxu0 %v109
    %396 = vmatpush.msra.mxu0 %v106
    %397 = vmatmul.f32.gmra.mxu0 %v340
    %v398 = vpop.f32.mrf.mxu0
    %v399 = vadd.f32 0.0, %v398
    %400 = vdwg.mxu0
    %v402 = vrot.slane %v359, 7
    %v404 = vadd.f32 %v190, %v402
    %v405 = vxor.u32 %v404, 2147483648
    %v406 = vmul.f32 %v405, 1.442695
    %v407 = vpow.pop %v406
    %v408 = vadd.f32 %v407, 1.0
    %v409 = vrcp.pop %v408
    %v410 = vmul.f32 %v408, %v409
    %v411 = vsub.f32 1.0, %v410
    %v412 = vmul.f32 %v409, %v411
    %v413 = vadd.f32 %v409, %v412
    %vm414 = vweird.f32 %v408
    %vm415 = vweird.f32 %v409
    %vm416 = vmor %vm414, %vm415
    %v417 = vsel %vm416, %v409, %v413
    %v418 = vand.u32 2147483647, %v408
    %vm419 = vcmp.eq.f32.partialorder %v418, 8.507059e+37
    %v420 = vand.u32 %v408, 2147483648
    %v421 = vor.u32 1.1754944e-38, %v420
    %v422 = vsel %vm419, %v421, %v417
    %v423 = vmul.f32 1.0, %v422
    %v425 = vrot.slane %v379, 7
    %v427 = vadd.f32 %v210, %v425
    %v428 = vxor.u32 %v427, 2147483648
    %v429 = vmul.f32 %v428, 1.442695
    %v430 = vpow.pop %v429
    %v431 = vadd.f32 %v430, 1.0
    %v432 = vrcp.pop %v431
    %v433 = vmul.f32 %v431, %v432
    %v434 = vsub.f32 1.0, %v433
    %v435 = vmul.f32 %v432, %v434
    %v436 = vadd.f32 %v432, %v435
    %vm437 = vweird.f32 %v431
    %vm438 = vweird.f32 %v432
    %vm439 = vmor %vm437, %vm438
    %v440 = vsel %vm439, %v432, %v436
    %v441 = vand.u32 2147483647, %v431
    %vm442 = vcmp.eq.f32.partialorder %v441, 8.507059e+37
    %v443 = vand.u32 %v431, 2147483648
    %v444 = vor.u32 1.1754944e-38, %v443
    %v445 = vsel %vm442, %v444, %v440
    %v446 = vmul.f32 1.0, %v445
    %v447 = vadd.f32 %v399, %v152
    %v449 = vrot.slane %v447, 7
    %v451 = vmul.f32 %v423, %v449
    %v452 = vadd.f32 %v230, %v451
    %v453 = vtanh.pop %v452
    %v454 = vsub.f32 1.0, %v446
    %v455 = vmul.f32 %v454, %v453
    %v457 = vrot.slane %v340, 7
    %v459 = vmul.f32 %v446, %v457
    %v460 = vadd.f32 %v455, %v459
    %v462 = vrot.slane %v460, 1
    %464 = vmatpush.msra.mxu0 %v149
    %465 = vmatpush.msra.mxu0 %v146
    %466 = vmatpush.msra.mxu0 %v143
    %467 = vmatpush.msra.mxu0 %v140
    %468 = vmatpush.msra.mxu0 %v137
    %469 = vmatpush.msra.mxu0 %v134
    %470 = vmatpush.msra.mxu0 %v131
    %471 = vmatpush.msra.mxu0 %v128
    %472 = vmatpush.msra.mxu0 %v125
    %473 = vmatpush.msra.mxu0 %v122
    %474 = vmatpush.msra.mxu0 %v119
    %475 = vmatpush.msra.mxu0 %v116
    %476 = vmatpush.msra.mxu0 %v113
    %477 = vmatpush.msra.mxu0 %v110
    %478 = vmatpush.msra.mxu0 %v107
    %479 = vmatpush.msra.mxu0 %v104
    %480 = vmatmul.f32.gmra.mxu0 %v462
    %v481 = vpop.f32.mrf.mxu0
    %v482 = vadd.f32 0.0, %v481
    %483 = vdwg.mxu0
    %484 = vmatpush.msra.mxu0 %v150
    %485 = vmatpush.msra.mxu0 %v147
    %486 = vmatpush.msra.mxu0 %v144
    %487 = vmatpush.msra.mxu0 %v141
    %488 = vmatpush.msra.mxu0 %v138
    %489 = vmatpush.msra.mxu0 %v135
    %490 = vmatpush.msra.mxu0 %v132
    %491 = vmatpush.msra.mxu0 %v129
    %492 = vmatpush.msra.mxu0 %v126
    %493 = vmatpush.msra.mxu0 %v123
    %494 = vmatpush.msra.mxu0 %v120
    %495 = vmatpush.msra.mxu0 %v117
    %496 = vmatpush.msra.mxu0 %v114
    %497 = vmatpush.msra.mxu0 %v111
    %498 = vmatpush.msra.mxu0 %v108
    %499 = vmatpush.msra.mxu0 %v105
    %500 = vmatmul.f32.gmra.mxu0 %v462
    %v501 = vpop.f32.mrf.mxu0
    %v502 = vadd.f32 0.0, %v501
    %503 = vdwg.mxu0
    %504 = vmatpush.msra.mxu0 %v151
    %505 = vmatpush.msra.mxu0 %v148
    %506 = vmatpush.msra.mxu0 %v145
    %507 = vmatpush.msra.mxu0 %v142
    %508 = vmatpush.msra.mxu0 %v139
    %509 = vmatpush.msra.mxu0 %v136
    %510 = vmatpush.msra.mxu0 %v133
    %511 = vmatpush.msra.mxu0 %v130
    %512 = vmatpush.msra.mxu0 %v127
    %513 = vmatpush.msra.mxu0 %v124
    %514 = vmatpush.msra.mxu0 %v121
    %515 = vmatpush.msra.mxu0 %v118
    %516 = vmatpush.msra.mxu0 %v115
    %517 = vmatpush.msra.mxu0 %v112
    %518 = vmatpush.msra.mxu0 %v109
    %519 = vmatpush.msra.mxu0 %v106
    %520 = vmatmul.f32.gmra.mxu0 %v462
    %v521 = vpop.f32.mrf.mxu0
    %v522 = vadd.f32 0.0, %v521
    %523 = vdwg.mxu0
    %v525 = vrot.slane %v482, 6
    %v527 = vadd.f32 %v190, %v525
    %v528 = vxor.u32 %v527, 2147483648
    %v529 = vmul.f32 %v528, 1.442695
    %v530 = vpow.pop %v529
    %v531 = vadd.f32 %v530, 1.0
    %v532 = vrcp.pop %v531
    %v533 = vmul.f32 %v531, %v532
    %v534 = vsub.f32 1.0, %v533
    %v535 = vmul.f32 %v532, %v534
    %v536 = vadd.f32 %v532, %v535
    %vm537 = vweird.f32 %v531
    %vm538 = vweird.f32 %v532
    %vm539 = vmor %vm537, %vm538
    %v540 = vsel %vm539, %v532, %v536
    %v541 = vand.u32 2147483647, %v531
    %vm542 = vcmp.eq.f32.partialorder %v541, 8.507059e+37
    %v543 = vand.u32 %v531, 2147483648
    %v544 = vor.u32 1.1754944e-38, %v543
    %v545 = vsel %vm542, %v544, %v540
    %v546 = vmul.f32 1.0, %v545
    %v548 = vrot.slane %v502, 6
    %v550 = vadd.f32 %v210, %v548
    %v551 = vxor.u32 %v550, 2147483648
    %v552 = vmul.f32 %v551, 1.442695
    %v553 = vpow.pop %v552
    %v554 = vadd.f32 %v553, 1.0
    %v555 = vrcp.pop %v554
    %v556 = vmul.f32 %v554, %v555
    %v557 = vsub.f32 1.0, %v556
    %v558 = vmul.f32 %v555, %v557
    %v559 = vadd.f32 %v555, %v558
    %vm560 = vweird.f32 %v554
    %vm561 = vweird.f32 %v555
    %vm562 = vmor %vm560, %vm561
    %v563 = vsel %vm562, %v555, %v559
    %v564 = vand.u32 2147483647, %v554
    %vm565 = vcmp.eq.f32.partialorder %v564, 8.507059e+37
    %v566 = vand.u32 %v554, 2147483648
    %v567 = vor.u32 1.1754944e-38, %v566
    %v568 = vsel %vm565, %v567, %v563
    %v569 = vmul.f32 1.0, %v568
    %v570 = vadd.f32 %v522, %v152
    %v572 = vrot.slane %v570, 6
    %v574 = vmul.f32 %v546, %v572
    %v575 = vadd.f32 %v230, %v574
    %v576 = vtanh.pop %v575
    %v577 = vsub.f32 1.0, %v569
    %v578 = vmul.f32 %v577, %v576
    %v579 = vrot.slane %v460, 7
    %v581 = vmul.f32 %v569, %v579
    %v582 = vadd.f32 %v578, %v581
    %v584 = vrot.slane %v582, 2
    %586 = vmatpush.msra.mxu0 %v149
    %587 = vmatpush.msra.mxu0 %v146
    %588 = vmatpush.msra.mxu0 %v143
    %589 = vmatpush.msra.mxu0 %v140
    %590 = vmatpush.msra.mxu0 %v137
    %591 = vmatpush.msra.mxu0 %v134
    %592 = vmatpush.msra.mxu0 %v131
    %593 = vmatpush.msra.mxu0 %v128
    %594 = vmatpush.msra.mxu0 %v125
    %595 = vmatpush.msra.mxu0 %v122
    %596 = vmatpush.msra.mxu0 %v119
    %597 = vmatpush.msra.mxu0 %v116
    %598 = vmatpush.msra.mxu0 %v113
    %599 = vmatpush.msra.mxu0 %v110
    %600 = vmatpush.msra.mxu0 %v107
    %601 = vmatpush.msra.mxu0 %v104
    %602 = vmatmul.f32.gmra.mxu0 %v584
    %v603 = vpop.f32.mrf.mxu0
    %v604 = vadd.f32 0.0, %v603
    %605 = vdwg.mxu0
    %606 = vmatpush.msra.mxu0 %v150
    %607 = vmatpush.msra.mxu0 %v147
    %608 = vmatpush.msra.mxu0 %v144
    %609 = vmatpush.msra.mxu0 %v141
    %610 = vmatpush.msra.mxu0 %v138
    %611 = vmatpush.msra.mxu0 %v135
    %612 = vmatpush.msra.mxu0 %v132
    %613 = vmatpush.msra.mxu0 %v129
    %614 = vmatpush.msra.mxu0 %v126
    %615 = vmatpush.msra.mxu0 %v123
    %616 = vmatpush.msra.mxu0 %v120
    %617 = vmatpush.msra.mxu0 %v117
    %618 = vmatpush.msra.mxu0 %v114
    %619 = vmatpush.msra.mxu0 %v111
    %620 = vmatpush.msra.mxu0 %v108
    %621 = vmatpush.msra.mxu0 %v105
    %622 = vmatmul.f32.gmra.mxu0 %v584
    %v623 = vpop.f32.mrf.mxu0
    %v624 = vadd.f32 0.0, %v623
    %625 = vdwg.mxu0
    %626 = vmatpush.msra.mxu0 %v151
    %627 = vmatpush.msra.mxu0 %v148
    %628 = vmatpush.msra.mxu0 %v145
    %629 = vmatpush.msra.mxu0 %v142
    %630 = vmatpush.msra.mxu0 %v139
    %631 = vmatpush.msra.mxu0 %v136
    %632 = vmatpush.msra.mxu0 %v133
    %633 = vmatpush.msra.mxu0 %v130
    %634 = vmatpush.msra.mxu0 %v127
    %635 = vmatpush.msra.mxu0 %v124
    %636 = vmatpush.msra.mxu0 %v121
    %637 = vmatpush.msra.mxu0 %v118
    %638 = vmatpush.msra.mxu0 %v115
    %639 = vmatpush.msra.mxu0 %v112
    %640 = vmatpush.msra.mxu0 %v109
    %641 = vmatpush.msra.mxu0 %v106
    %642 = vmatmul.f32.gmra.mxu0 %v584
    %v643 = vpop.f32.mrf.mxu0
    %v644 = vadd.f32 0.0, %v643
    %645 = vdwg.mxu0
    %v647 = vrot.slane %v604, 5
    %v649 = vadd.f32 %v190, %v647
    %v650 = vxor.u32 %v649, 2147483648
    %v651 = vmul.f32 %v650, 1.442695
    %v652 = vpow.pop %v651
    %v653 = vadd.f32 %v652, 1.0
    %v654 = vrcp.pop %v653
    %v655 = vmul.f32 %v653, %v654
    %v656 = vsub.f32 1.0, %v655
    %v657 = vmul.f32 %v654, %v656
    %v658 = vadd.f32 %v654, %v657
    %vm659 = vweird.f32 %v653
    %vm660 = vweird.f32 %v654
    %vm661 = vmor %vm659, %vm660
    %v662 = vsel %vm661, %v654, %v658
    %v663 = vand.u32 2147483647, %v653
    %vm664 = vcmp.eq.f32.partialorder %v663, 8.507059e+37
    %v665 = vand.u32 %v653, 2147483648
    %v666 = vor.u32 1.1754944e-38, %v665
    %v667 = vsel %vm664, %v666, %v662
    %v668 = vmul.f32 1.0, %v667
    %v670 = vrot.slane %v624, 5
    %v672 = vadd.f32 %v210, %v670
    %v673 = vxor.u32 %v672, 2147483648
    %v674 = vmul.f32 %v673, 1.442695
    %v675 = vpow.pop %v674
    %v676 = vadd.f32 %v675, 1.0
    %v677 = vrcp.pop %v676
    %v678 = vmul.f32 %v676, %v677
    %v679 = vsub.f32 1.0, %v678
    %v680 = vmul.f32 %v677, %v679
    %v681 = vadd.f32 %v677, %v680
    %vm682 = vweird.f32 %v676
    %vm683 = vweird.f32 %v677
    %vm684 = vmor %vm682, %vm683
    %v685 = vsel %vm684, %v677, %v681
    %v686 = vand.u32 2147483647, %v676
    %vm687 = vcmp.eq.f32.partialorder %v686, 8.507059e+37
    %v688 = vand.u32 %v676, 2147483648
    %v689 = vor.u32 1.1754944e-38, %v688
    %v690 = vsel %vm687, %v689, %v685
    %v691 = vmul.f32 1.0, %v690
    %v692 = vadd.f32 %v644, %v152
    %v694 = vrot.slane %v692, 5
    %v696 = vmul.f32 %v668, %v694
    %v697 = vadd.f32 %v230, %v696
    %v698 = vtanh.pop %v697
    %v699 = vsub.f32 1.0, %v691
    %v700 = vmul.f32 %v699, %v698
    %v701 = vrot.slane %v582, 7
    %v703 = vmul.f32 %v691, %v701
    %v704 = vadd.f32 %v700, %v703
    %v706 = vrot.slane %v704, 3
    %708 = vmatpush.msra.mxu0 %v149
    %709 = vmatpush.msra.mxu0 %v146
    %710 = vmatpush.msra.mxu0 %v143
    %711 = vmatpush.msra.mxu0 %v140
    %712 = vmatpush.msra.mxu0 %v137
    %713 = vmatpush.msra.mxu0 %v134
    %714 = vmatpush.msra.mxu0 %v131
    %715 = vmatpush.msra.mxu0 %v128
    %716 = vmatpush.msra.mxu0 %v125
    %717 = vmatpush.msra.mxu0 %v122
    %718 = vmatpush.msra.mxu0 %v119
    %719 = vmatpush.msra.mxu0 %v116
    %720 = vmatpush.msra.mxu0 %v113
    %721 = vmatpush.msra.mxu0 %v110
    %722 = vmatpush.msra.mxu0 %v107
    %723 = vmatpush.msra.mxu0 %v104
    %724 = vmatmul.f32.gmra.mxu0 %v706
    %v725 = vpop.f32.mrf.mxu0
    %v726 = vadd.f32 0.0, %v725
    %727 = vdwg.mxu0
    %728 = vmatpush.msra.mxu0 %v150
    %729 = vmatpush.msra.mxu0 %v147
    %730 = vmatpush.msra.mxu0 %v144
    %731 = vmatpush.msra.mxu0 %v141
    %732 = vmatpush.msra.mxu0 %v138
    %733 = vmatpush.msra.mxu0 %v135
    %734 = vmatpush.msra.mxu0 %v132
    %735 = vmatpush.msra.mxu0 %v129
    %736 = vmatpush.msra.mxu0 %v126
    %737 = vmatpush.msra.mxu0 %v123
    %738 = vmatpush.msra.mxu0 %v120
    %739 = vmatpush.msra.mxu0 %v117
    %740 = vmatpush.msra.mxu0 %v114
    %741 = vmatpush.msra.mxu0 %v111
    %742 = vmatpush.msra.mxu0 %v108
    %743 = vmatpush.msra.mxu0 %v105
    %744 = vmatmul.f32.gmra.mxu0 %v706
    %v745 = vpop.f32.mrf.mxu0
    %v746 = vadd.f32 0.0, %v745
    %747 = vdwg.mxu0
    %748 = vmatpush.msra.mxu0 %v151
    %749 = vmatpush.msra.mxu0 %v148
    %750 = vmatpush.msra.mxu0 %v145
    %751 = vmatpush.msra.mxu0 %v142
    %752 = vmatpush.msra.mxu0 %v139
    %753 = vmatpush.msra.mxu0 %v136
    %754 = vmatpush.msra.mxu0 %v133
    %755 = vmatpush.msra.mxu0 %v130
    %756 = vmatpush.msra.mxu0 %v127
    %757 = vmatpush.msra.mxu0 %v124
    %758 = vmatpush.msra.mxu0 %v121
    %759 = vmatpush.msra.mxu0 %v118
    %760 = vmatpush.msra.mxu0 %v115
    %761 = vmatpush.msra.mxu0 %v112
    %762 = vmatpush.msra.mxu0 %v109
    %763 = vmatpush.msra.mxu0 %v106
    %764 = vmatmul.f32.gmra.mxu0 %v706
    %v765 = vpop.f32.mrf.mxu0
    %v766 = vadd.f32 0.0, %v765
    %767 = vdwg.mxu0
    %v769 = vrot.slane %v726, 4
    %v771 = vadd.f32 %v190, %v769
    %v772 = vxor.u32 %v771, 2147483648
    %v773 = vmul.f32 %v772, 1.442695
    %v774 = vpow.pop %v773
    %v775 = vadd.f32 %v774, 1.0
    %v776 = vrcp.pop %v775
    %v777 = vmul.f32 %v775, %v776
    %v778 = vsub.f32 1.0, %v777
    %v779 = vmul.f32 %v776, %v778
    %v780 = vadd.f32 %v776, %v779
    %vm781 = vweird.f32 %v775
    %vm782 = vweird.f32 %v776
    %vm783 = vmor %vm781, %vm782
    %v784 = vsel %vm783, %v776, %v780
    %v785 = vand.u32 2147483647, %v775
    %vm786 = vcmp.eq.f32.partialorder %v785, 8.507059e+37
    %v787 = vand.u32 %v775, 2147483648
    %v788 = vor.u32 1.1754944e-38, %v787
    %v789 = vsel %vm786, %v788, %v784
    %v790 = vmul.f32 1.0, %v789
    %v792 = vrot.slane %v746, 4
    %v794 = vadd.f32 %v210, %v792
    %v795 = vxor.u32 %v794, 2147483648
    %v796 = vmul.f32 %v795, 1.442695
    %v797 = vpow.pop %v796
    %v798 = vadd.f32 %v797, 1.0
    %v799 = vrcp.pop %v798
    %v800 = vmul.f32 %v798, %v799
    %v801 = vsub.f32 1.0, %v800
    %v802 = vmul.f32 %v799, %v801
    %v803 = vadd.f32 %v799, %v802
    %vm804 = vweird.f32 %v798
    %vm805 = vweird.f32 %v799
    %vm806 = vmor %vm804, %vm805
    %v807 = vsel %vm806, %v799, %v803
    %v808 = vand.u32 2147483647, %v798
    %vm809 = vcmp.eq.f32.partialorder %v808, 8.507059e+37
    %v810 = vand.u32 %v798, 2147483648
    %v811 = vor.u32 1.1754944e-38, %v810
    %v812 = vsel %vm809, %v811, %v807
    %v813 = vmul.f32 1.0, %v812
    %v814 = vadd.f32 %v766, %v152
    %v816 = vrot.slane %v814, 4
    %v818 = vmul.f32 %v790, %v816
    %v819 = vadd.f32 %v230, %v818
    %v820 = vtanh.pop %v819
    %v821 = vsub.f32 1.0, %v813
    %v822 = vmul.f32 %v821, %v820
    %v823 = vrot.slane %v704, 7
    %v825 = vmul.f32 %v813, %v823
    %v826 = vadd.f32 %v822, %v825
    %v828 = vrot.slane %v826, 4
    %830 = vmatpush.msra.mxu0 %v149
    %831 = vmatpush.msra.mxu0 %v146
    %832 = vmatpush.msra.mxu0 %v143
    %833 = vmatpush.msra.mxu0 %v140
    %834 = vmatpush.msra.mxu0 %v137
    %835 = vmatpush.msra.mxu0 %v134
    %836 = vmatpush.msra.mxu0 %v131
    %837 = vmatpush.msra.mxu0 %v128
    %838 = vmatpush.msra.mxu0 %v125
    %839 = vmatpush.msra.mxu0 %v122
    %840 = vmatpush.msra.mxu0 %v119
    %841 = vmatpush.msra.mxu0 %v116
    %842 = vmatpush.msra.mxu0 %v113
    %843 = vmatpush.msra.mxu0 %v110
    %844 = vmatpush.msra.mxu0 %v107
    %845 = vmatpush.msra.mxu0 %v104
    %846 = vmatmul.f32.gmra.mxu0 %v828
    %v847 = vpop.f32.mrf.mxu0
    %v848 = vadd.f32 0.0, %v847
    %849 = vdwg.mxu0
    %850 = vmatpush.msra.mxu0 %v150
    %851 = vmatpush.msra.mxu0 %v147
    %852 = vmatpush.msra.mxu0 %v144
    %853 = vmatpush.msra.mxu0 %v141
    %854 = vmatpush.msra.mxu0 %v138
    %855 = vmatpush.msra.mxu0 %v135
    %856 = vmatpush.msra.mxu0 %v132
    %857 = vmatpush.msra.mxu0 %v129
    %858 = vmatpush.msra.mxu0 %v126
    %859 = vmatpush.msra.mxu0 %v123
    %860 = vmatpush.msra.mxu0 %v120
    %861 = vmatpush.msra.mxu0 %v117
    %862 = vmatpush.msra.mxu0 %v114
    %863 = vmatpush.msra.mxu0 %v111
    %864 = vmatpush.msra.mxu0 %v108
    %865 = vmatpush.msra.mxu0 %v105
    %866 = vmatmul.f32.gmra.mxu0 %v828
    %v867 = vpop.f32.mrf.mxu0
    %v868 = vadd.f32 0.0, %v867
    %869 = vdwg.mxu0
    %870 = vmatpush.msra.mxu0 %v151
    %871 = vmatpush.msra.mxu0 %v148
    %872 = vmatpush.msra.mxu0 %v145
    %873 = vmatpush.msra.mxu0 %v142
    %874 = vmatpush.msra.mxu0 %v139
    %875 = vmatpush.msra.mxu0 %v136
    %876 = vmatpush.msra.mxu0 %v133
    %877 = vmatpush.msra.mxu0 %v130
    %878 = vmatpush.msra.mxu0 %v127
    %879 = vmatpush.msra.mxu0 %v124
    %880 = vmatpush.msra.mxu0 %v121
    %881 = vmatpush.msra.mxu0 %v118
    %882 = vmatpush.msra.mxu0 %v115
    %883 = vmatpush.msra.mxu0 %v112
    %884 = vmatpush.msra.mxu0 %v109
    %885 = vmatpush.msra.mxu0 %v106
    %886 = vmatmul.f32.gmra.mxu0 %v828
    %v887 = vpop.f32.mrf.mxu0
    %v888 = vadd.f32 0.0, %v887
    %889 = vdwg.mxu0
    %v891 = vrot.slane %v848, 3
    %v893 = vadd.f32 %v190, %v891
    %v894 = vxor.u32 %v893, 2147483648
    %v895 = vmul.f32 %v894, 1.442695
    %v896 = vpow.pop %v895
    %v897 = vadd.f32 %v896, 1.0
    %v898 = vrcp.pop %v897
    %v899 = vmul.f32 %v897, %v898
    %v900 = vsub.f32 1.0, %v899
    %v901 = vmul.f32 %v898, %v900
    %v902 = vadd.f32 %v898, %v901
    %vm903 = vweird.f32 %v897
    %vm904 = vweird.f32 %v898
    %vm905 = vmor %vm903, %vm904
    %v906 = vsel %vm905, %v898, %v902
    %v907 = vand.u32 2147483647, %v897
    %vm908 = vcmp.eq.f32.partialorder %v907, 8.507059e+37
    %v909 = vand.u32 %v897, 2147483648
    %v910 = vor.u32 1.1754944e-38, %v909
    %v911 = vsel %vm908, %v910, %v906
    %v912 = vmul.f32 1.0, %v911
    %v914 = vrot.slane %v868, 3
    %v916 = vadd.f32 %v210, %v914
    %v917 = vxor.u32 %v916, 2147483648
    %v918 = vmul.f32 %v917, 1.442695
    %v919 = vpow.pop %v918
    %v920 = vadd.f32 %v919, 1.0
    %v921 = vrcp.pop %v920
    %v922 = vmul.f32 %v920, %v921
    %v923 = vsub.f32 1.0, %v922
    %v924 = vmul.f32 %v921, %v923
    %v925 = vadd.f32 %v921, %v924
    %vm926 = vweird.f32 %v920
    %vm927 = vweird.f32 %v921
    %vm928 = vmor %vm926, %vm927
    %v929 = vsel %vm928, %v921, %v925
    %v930 = vand.u32 2147483647, %v920
    %vm931 = vcmp.eq.f32.partialorder %v930, 8.507059e+37
    %v932 = vand.u32 %v920, 2147483648
    %v933 = vor.u32 1.1754944e-38, %v932
    %v934 = vsel %vm931, %v933, %v929
    %v935 = vmul.f32 1.0, %v934
    %v936 = vadd.f32 %v888, %v152
    %v938 = vrot.slane %v936, 3
    %v940 = vmul.f32 %v912, %v938
    %v941 = vadd.f32 %v230, %v940
    %v942 = vtanh.pop %v941
    %v943 = vsub.f32 1.0, %v935
    %v944 = vmul.f32 %v943, %v942
    %v945 = vrot.slane %v826, 7
    %v947 = vmul.f32 %v935, %v945
    %v948 = vadd.f32 %v944, %v947
    %v950 = vrot.slane %v948, 5
    %952 = vmatpush.msra.mxu0 %v149
    %953 = vmatpush.msra.mxu0 %v146
    %954 = vmatpush.msra.mxu0 %v143
    %955 = vmatpush.msra.mxu0 %v140
    %956 = vmatpush.msra.mxu0 %v137
    %957 = vmatpush.msra.mxu0 %v134
    %958 = vmatpush.msra.mxu0 %v131
    %959 = vmatpush.msra.mxu0 %v128
    %960 = vmatpush.msra.mxu0 %v125
    %961 = vmatpush.msra.mxu0 %v122
    %962 = vmatpush.msra.mxu0 %v119
    %963 = vmatpush.msra.mxu0 %v116
    %964 = vmatpush.msra.mxu0 %v113
    %965 = vmatpush.msra.mxu0 %v110
    %966 = vmatpush.msra.mxu0 %v107
    %967 = vmatpush.msra.mxu0 %v104
    %968 = vmatmul.f32.gmra.mxu0 %v950
    %v969 = vpop.f32.mrf.mxu0
    %v970 = vadd.f32 0.0, %v969
    %971 = vdwg.mxu0
    %972 = vmatpush.msra.mxu0 %v150
    %973 = vmatpush.msra.mxu0 %v147
    %974 = vmatpush.msra.mxu0 %v144
    %975 = vmatpush.msra.mxu0 %v141
    %976 = vmatpush.msra.mxu0 %v138
    %977 = vmatpush.msra.mxu0 %v135
    %978 = vmatpush.msra.mxu0 %v132
    %979 = vmatpush.msra.mxu0 %v129
    %980 = vmatpush.msra.mxu0 %v126
    %981 = vmatpush.msra.mxu0 %v123
    %982 = vmatpush.msra.mxu0 %v120
    %983 = vmatpush.msra.mxu0 %v117
    %984 = vmatpush.msra.mxu0 %v114
    %985 = vmatpush.msra.mxu0 %v111
    %986 = vmatpush.msra.mxu0 %v108
    %987 = vmatpush.msra.mxu0 %v105
    %988 = vmatmul.f32.gmra.mxu0 %v950
    %v989 = vpop.f32.mrf.mxu0
    %v990 = vadd.f32 0.0, %v989
    %991 = vdwg.mxu0
    %992 = vmatpush.msra.mxu0 %v151
    %993 = vmatpush.msra.mxu0 %v148
    %994 = vmatpush.msra.mxu0 %v145
    %995 = vmatpush.msra.mxu0 %v142
    %996 = vmatpush.msra.mxu0 %v139
    %997 = vmatpush.msra.mxu0 %v136
    %998 = vmatpush.msra.mxu0 %v133
    %999 = vmatpush.msra.mxu0 %v130
    %1000 = vmatpush.msra.mxu0 %v127
    %1001 = vmatpush.msra.mxu0 %v124
    %1002 = vmatpush.msra.mxu0 %v121
    %1003 = vmatpush.msra.mxu0 %v118
    %1004 = vmatpush.msra.mxu0 %v115
    %1005 = vmatpush.msra.mxu0 %v112
    %1006 = vmatpush.msra.mxu0 %v109
    %1007 = vmatpush.msra.mxu0 %v106
    %1008 = vmatmul.f32.gmra.mxu0 %v950
    %v1009 = vpop.f32.mrf.mxu0
    %v1010 = vadd.f32 0.0, %v1009
    %1011 = vdwg.mxu0
    %v1013 = vrot.slane %v970, 2
    %v1015 = vadd.f32 %v190, %v1013
    %v1016 = vxor.u32 %v1015, 2147483648
    %v1017 = vmul.f32 %v1016, 1.442695
    %v1018 = vpow.pop %v1017
    %v1019 = vadd.f32 %v1018, 1.0
    %v1020 = vrcp.pop %v1019
    %v1021 = vmul.f32 %v1019, %v1020
    %v1022 = vsub.f32 1.0, %v1021
    %v1023 = vmul.f32 %v1020, %v1022
    %v1024 = vadd.f32 %v1020, %v1023
    %vm1025 = vweird.f32 %v1019
    %vm1026 = vweird.f32 %v1020
    %vm1027 = vmor %vm1025, %vm1026
    %v1028 = vsel %vm1027, %v1020, %v1024
    %v1029 = vand.u32 2147483647, %v1019
    %vm1030 = vcmp.eq.f32.partialorder %v1029, 8.507059e+37
    %v1031 = vand.u32 %v1019, 2147483648
    %v1032 = vor.u32 1.1754944e-38, %v1031
    %v1033 = vsel %vm1030, %v1032, %v1028
    %v1034 = vmul.f32 1.0, %v1033
    %v1036 = vrot.slane %v990, 2
    %v1038 = vadd.f32 %v210, %v1036
    %v1039 = vxor.u32 %v1038, 2147483648
    %v1040 = vmul.f32 %v1039, 1.442695
    %v1041 = vpow.pop %v1040
    %v1042 = vadd.f32 %v1041, 1.0
    %v1043 = vrcp.pop %v1042
    %v1044 = vmul.f32 %v1042, %v1043
    %v1045 = vsub.f32 1.0, %v1044
    %v1046 = vmul.f32 %v1043, %v1045
    %v1047 = vadd.f32 %v1043, %v1046
    %vm1048 = vweird.f32 %v1042
    %vm1049 = vweird.f32 %v1043
    %vm1050 = vmor %vm1048, %vm1049
    %v1051 = vsel %vm1050, %v1043, %v1047
    %v1052 = vand.u32 2147483647, %v1042
    %vm1053 = vcmp.eq.f32.partialorder %v1052, 8.507059e+37
    %v1054 = vand.u32 %v1042, 2147483648
    %v1055 = vor.u32 1.1754944e-38, %v1054
    %v1056 = vsel %vm1053, %v1055, %v1051
    %v1057 = vmul.f32 1.0, %v1056
    %v1058 = vadd.f32 %v1010, %v152
    %v1060 = vrot.slane %v1058, 2
    %v1062 = vmul.f32 %v1034, %v1060
    %v1063 = vadd.f32 %v230, %v1062
    %v1064 = vtanh.pop %v1063
    %v1065 = vsub.f32 1.0, %v1057
    %v1066 = vmul.f32 %v1065, %v1064
    %v1067 = vrot.slane %v948, 7
    %v1069 = vmul.f32 %v1057, %v1067
    %v1070 = vadd.f32 %v1066, %v1069
    %v1072 = vrot.slane %v1070, 6
    %1074 = vmatpush.msra.mxu0 %v149
    %1075 = vmatpush.msra.mxu0 %v146
    %1076 = vmatpush.msra.mxu0 %v143
    %1077 = vmatpush.msra.mxu0 %v140
    %1078 = vmatpush.msra.mxu0 %v137
    %1079 = vmatpush.msra.mxu0 %v134
    %1080 = vmatpush.msra.mxu0 %v131
    %1081 = vmatpush.msra.mxu0 %v128
    %1082 = vmatpush.msra.mxu0 %v125
    %1083 = vmatpush.msra.mxu0 %v122
    %1084 = vmatpush.msra.mxu0 %v119
    %1085 = vmatpush.msra.mxu0 %v116
    %1086 = vmatpush.msra.mxu0 %v113
    %1087 = vmatpush.msra.mxu0 %v110
    %1088 = vmatpush.msra.mxu0 %v107
    %1089 = vmatpush.msra.mxu0 %v104
    %1090 = vmatmul.f32.gmra.mxu0 %v1072
    %v1091 = vpop.f32.mrf.mxu0
    %v1092 = vadd.f32 0.0, %v1091
    %1093 = vdwg.mxu0
    %1094 = vmatpush.msra.mxu0 %v150
    %1095 = vmatpush.msra.mxu0 %v147
    %1096 = vmatpush.msra.mxu0 %v144
    %1097 = vmatpush.msra.mxu0 %v141
    %1098 = vmatpush.msra.mxu0 %v138
    %1099 = vmatpush.msra.mxu0 %v135
    %1100 = vmatpush.msra.mxu0 %v132
    %1101 = vmatpush.msra.mxu0 %v129
    %1102 = vmatpush.msra.mxu0 %v126
    %1103 = vmatpush.msra.mxu0 %v123
    %1104 = vmatpush.msra.mxu0 %v120
    %1105 = vmatpush.msra.mxu0 %v117
    %1106 = vmatpush.msra.mxu0 %v114
    %1107 = vmatpush.msra.mxu0 %v111
    %1108 = vmatpush.msra.mxu0 %v108
    %1109 = vmatpush.msra.mxu0 %v105
    %1110 = vmatmul.f32.gmra.mxu0 %v1072
    %v1111 = vpop.f32.mrf.mxu0
    %v1112 = vadd.f32 0.0, %v1111
    %1113 = vdwg.mxu0
    %1114 = vmatpush.msra.mxu0 %v151
    %1115 = vmatpush.msra.mxu0 %v148
    %1116 = vmatpush.msra.mxu0 %v145
    %1117 = vmatpush.msra.mxu0 %v142
    %1118 = vmatpush.msra.mxu0 %v139
    %1119 = vmatpush.msra.mxu0 %v136
    %1120 = vmatpush.msra.mxu0 %v133
    %1121 = vmatpush.msra.mxu0 %v130
    %1122 = vmatpush.msra.mxu0 %v127
    %1123 = vmatpush.msra.mxu0 %v124
    %1124 = vmatpush.msra.mxu0 %v121
    %1125 = vmatpush.msra.mxu0 %v118
    %1126 = vmatpush.msra.mxu0 %v115
    %1127 = vmatpush.msra.mxu0 %v112
    %1128 = vmatpush.msra.mxu0 %v109
    %1129 = vmatpush.msra.mxu0 %v106
    %1130 = vmatmul.f32.gmra.mxu0 %v1072
    %v1131 = vpop.f32.mrf.mxu0
    %v1132 = vadd.f32 0.0, %v1131
    %1133 = vdwg.mxu0
    %v1135 = vrot.slane %v1092, 1
    %v1137 = vadd.f32 %v190, %v1135
    %v1138 = vxor.u32 %v1137, 2147483648
    %v1139 = vmul.f32 %v1138, 1.442695
    %v1140 = vpow.pop %v1139
    %v1141 = vadd.f32 %v1140, 1.0
    %v1142 = vrcp.pop %v1141
    %v1143 = vmul.f32 %v1141, %v1142
    %v1144 = vsub.f32 1.0, %v1143
    %v1145 = vmul.f32 %v1142, %v1144
    %v1146 = vadd.f32 %v1142, %v1145
    %vm1147 = vweird.f32 %v1141
    %vm1148 = vweird.f32 %v1142
    %vm1149 = vmor %vm1147, %vm1148
    %v1150 = vsel %vm1149, %v1142, %v1146
    %v1151 = vand.u32 2147483647, %v1141
    %vm1152 = vcmp.eq.f32.partialorder %v1151, 8.507059e+37
    %v1153 = vand.u32 %v1141, 2147483648
    %v1154 = vor.u32 1.1754944e-38, %v1153
    %v1155 = vsel %vm1152, %v1154, %v1150
    %v1156 = vmul.f32 1.0, %v1155
    %v1158 = vrot.slane %v1112, 1
    %v1160 = vadd.f32 %v210, %v1158
    %v1161 = vxor.u32 %v1160, 2147483648
    %v1162 = vmul.f32 %v1161, 1.442695
    %v1163 = vpow.pop %v1162
    %v1164 = vadd.f32 %v1163, 1.0
    %v1165 = vrcp.pop %v1164
    %v1166 = vmul.f32 %v1164, %v1165
    %v1167 = vsub.f32 1.0, %v1166
    %v1168 = vmul.f32 %v1165, %v1167
    %v1169 = vadd.f32 %v1165, %v1168
    %vm1170 = vweird.f32 %v1164
    %vm1171 = vweird.f32 %v1165
    %vm1172 = vmor %vm1170, %vm1171
    %v1173 = vsel %vm1172, %v1165, %v1169
    %v1174 = vand.u32 2147483647, %v1164
    %vm1175 = vcmp.eq.f32.partialorder %v1174, 8.507059e+37
    %v1176 = vand.u32 %v1164, 2147483648
    %v1177 = vor.u32 1.1754944e-38, %v1176
    %v1178 = vsel %vm1175, %v1177, %v1173
    %v1179 = vmul.f32 1.0, %v1178
    %v1180 = vadd.f32 %v1132, %v152
    %v1182 = vrot.slane %v1180, 1
    %v1184 = vmul.f32 %v1156, %v1182
    %v1185 = vadd.f32 %v230, %v1184
    %v1186 = vtanh.pop %v1185
    %v1187 = vsub.f32 1.0, %v1179
    %v1188 = vmul.f32 %v1187, %v1186
    %v1189 = vrot.slane %v1070, 7
    %v1191 = vmul.f32 %v1179, %v1189
    %v1192 = vadd.f32 %v1188, %v1191
    %1193 = vst [vmem:[#allocation12 - $0x7] sm:$0x80] %v1192
    %v1194 = vld [vmem:[#allocation10] sm:$0xff]
    %v1195 = vld [vmem:[#allocation10 + $0x8] sm:$0xff]
    %v1196 = vld [vmem:[#allocation10 + $0x10] sm:$0xff]
    %v1197 = vld [vmem:[#allocation10 + $0x18] sm:$0xff]
    %v1198 = vld [vmem:[#allocation10 + $0x20] sm:$0xff]
    %v1199 = vld [vmem:[#allocation10 + $0x28] sm:$0xff]
    %v1200 = vld [vmem:[#allocation10 + $0x30] sm:$0xff]
    %v1201 = vld [vmem:[#allocation10 + $0x38] sm:$0xff]
    %v1202 = vld [vmem:[#allocation10 + $0x40] sm:$0xff]
    %v1203 = vld [vmem:[#allocation10 + $0x48] sm:$0xff]
    %v1204 = vld [vmem:[#allocation10 + $0x50] sm:$0xff]
    %v1205 = vld [vmem:[#allocation10 + $0x58] sm:$0xff]
    %v1206 = vld [vmem:[#allocation10 + $0x60] sm:$0xff]
    %v1207 = vld [vmem:[#allocation10 + $0x68] sm:$0xff]
    %v1208 = vld [vmem:[#allocation10 + $0x70] sm:$0xff]
    %v1209 = vld [vmem:[#allocation10 + $0x78] sm:$0xff]
    %v1210 = vld [vmem:[%s6] sm:$0x1]
    %v1212 = vrot.slane %v1192, 7
    %1214 = vmatpush.msra.mxu0 %v1209
    %1215 = vmatpush.msra.mxu0 %v1208
    %1216 = vmatpush.msra.mxu0 %v1207
    %1217 = vmatpush.msra.mxu0 %v1206
    %1218 = vmatpush.msra.mxu0 %v1205
    %1219 = vmatpush.msra.mxu0 %v1204
    %1220 = vmatpush.msra.mxu0 %v1203
    %1221 = vmatpush.msra.mxu0 %v1202
    %1222 = vmatpush.msra.mxu0 %v1201
    %1223 = vmatpush.msra.mxu0 %v1200
    %1224 = vmatpush.msra.mxu0 %v1199
    %1225 = vmatpush.msra.mxu0 %v1198
    %1226 = vmatpush.msra.mxu0 %v1197
    %1227 = vmatpush.msra.mxu0 %v1196
    %1228 = vmatpush.msra.mxu0 %v1195
    %1229 = vmatpush.msra.mxu0 %v1194
    %1230 = vmatmul.f32.gmra.mxu0 %v1212
    %v1231 = vpop.f32.mrf.mxu0
    %v1232 = vadd.f32 %v1210, %v1231
    %1233 = vdwg.mxu0
    %vm1234 = vcmask 1040384
    %v1235 = vsel %vm1234, %v1232, -inf
    %1236 = vmax.xlane.f32.xlu0 %v1235
    %v1237 = vpop.xlane.xlu0 %1236
    %v1238 = vsub.f32 %v1232, %v1237
    %v1239 = vmul.f32 %v1238, 1.442695
    %v1240 = vpow.pop %v1239
    %v1241 = vsel %vm1234, %v1240, 0.0
    %1242 = vadd.xlane.f32.xlu0 %v1241
    %v1243 = vpop.xlane.xlu0 %1242
    %v1244 = vlog2.pop %v1243
    %v1245 = vmul.f32 %v1244, 0.6931472
    %v1246 = vsub.f32 %v1238, %v1245
    %1247 = vst [vmem:[#allocation11] sm:$0x1] %v1246
    // Predicated region
    $region50: #{tpu_custom_call.1} parent=1 // pred_check
      _
    $region51: #{tpu_custom_call.1} parent=1 // pred_check_branch
      %1249 = sbr.rel (0) target = $region53
    $region52: #{tpu_custom_call.1} parent=1 // pred_region
      %1251 = vsyncadd [#allocation4], 0
      %s1253 = sshll.u32 [#allocation11], 4
      %s1254 = int_to_ptr.vmem [resolvable:$true] %s1253
      %s1255 = sshll.u32 %s7, 4
      %s1256 = int_to_ptr.hbm [resolvable:$true] %s1255
      %1258 = dma.vmem_to_hbm [thread:$0]  %s1254, 16, %s1256, [#allocation4]
    $region53: #{tpu_custom_call.1} parent=1 // pred_fallthru
      _
    // Predicated region
    $region54: #{tpu_custom_call.1} parent=1 // pred_check
      _
    $region55: #{tpu_custom_call.1} parent=1 // pred_check_branch
      %1260 = sbr.rel (0) target = $region57
    $region56: #{tpu_custom_call.1} parent=1 // pred_region
      %1262 = vsyncadd [#allocation13], 0
      %s1264 = sshll.u32 [#allocation12], 4
      %s1265 = int_to_ptr.vmem [resolvable:$true] %s1264
      %s1266 = sshll.u32 %s8, 4
      %s1267 = int_to_ptr.hbm [resolvable:$true] %s1266
      %1269 = dma.vmem_to_hbm [thread:$0]  %s1265, 16, %s1267, [#allocation13]
    $region57: #{tpu_custom_call.1} parent=1 // pred_fallthru
      _
    // Predicated region
    $region58: #{tpu_custom_call.1} parent=1 // pred_check
      _
    $region59: #{tpu_custom_call.1} parent=1 // pred_check_branch
      %1271 = sbr.rel (0) target = $region61
    $region60: #{tpu_custom_call.1} parent=1 // pred_region
      %1273 = dma.done [#allocation4], 16
    $region61: #{tpu_custom_call.1} parent=1 // pred_fallthru
      _
    // Predicated region
    $region62: #{tpu_custom_call.1} parent=1 // pred_check
      _
    $region63: #{tpu_custom_call.1} parent=1 // pred_check_branch
      %1275 = sbr.rel (0) target = $region65
    $region64: #{tpu_custom_call.1} parent=1 // pred_region
      %1277 = dma.done [#allocation13], 16
    $region65: #{tpu_custom_call.1} parent=1 // pred_fallthru
      _
    %1278 = vsyncpa [#allocation3], 1
    %1279 = vsyncpa [#allocation6], 1
    %1280 = vsyncpa [#allocation9], 1
    %1281 = vsyncpa [#allocation4], 1
    %1282 = vsyncpa [#allocation13], 1

</llo_original>
